<compile_context>
chip_gen: v5e
topology: v5e:2x2
jax: 0.10.0
libtpu: 0.0.40
codegen_flags: <defaults>
</compile_context>

<pallas_src>
import math
import jax
import jax.numpy as jnp
from jax.experimental import pallas as pl
from jax.experimental.pallas import tpu as pltpu

# ---------------- small synthetic config ----------------
BATCH = 2
IN_PLANES = 64            # cfg.MODEL.FPN.OUT_CHANNELS
RPN_DIM = IN_PLANES       # StandardRPNHead(in_planes, in_planes, ...)
SIZES = ((32.0,), (64.0,), (128.0,), (256.0,), (512.0,))   # ANCHOR_GENERATOR.SIZES
RATIOS = (0.5, 1.0, 2.0)                                   # ANCHOR_GENERATOR.ASPECT_RATIOS
NUM_ANCHORS = len(SIZES[0]) * len(RATIOS)                  # 3
FEAT_STRIDES = (4, 8, 16, 32, 64)
IM_H, IM_W = 64, 64
PRE_NMS_TOPK = 32         # cfg.MODEL.RPN.PRE_NMS_TOPK_TEST
POST_NMS_TOPK = 16        # cfg.MODEL.RPN.POST_NMS_TOPK_TEST
IOU_THRESH = 0.7
RPN_MIN_SIZE = 0.0
SCALE_CLAMP = math.log(1000.0 / 16.0)

GROUP = 8                 # sublane-aligned row group (A=3 valid rows + 5 zero pad rows)
HEAD_ROWS = 5 * GROUP     # [logits | dx | dy | dw | dh] -> 40 rows, all slices (8,128)-aligned


# ---------------- fused Pallas kernel: 3x3 conv (im2col) + 1x1 heads + anchor decode ----------------
def fused_rpn_kernel(x_ref, wc_ref, bc_ref, wh_ref, bh_ref, anch_ref, out_ref):
    # x_ref    : [9*Cin, Lt]   bf16  im2col patches; lanes = image-major, pixel-minor (all levels)
    # wc_ref   : [Cm, 9*Cin]   bf16  3x3 conv weight, transposed
    # bc_ref   : [Cm, 1]       f32
    # wh_ref   : [40, Cm]      bf16  merged 1x1 heads, rows 8-aligned: [obj | dx | dy | dw | dh]
    # bh_ref   : [40, 1]       f32
    # anch_ref : [32, Lt]      f32   anchors in (cx, cy, w, h) form, 8-row groups
    # out_ref  : [40, Lt]      f32   rows: [sigmoid logits | x1 | y1 | x2 | y2], 8-row groups
    G = GROUP

    # conv2d_bias_relu (3x3, pad 1) as one K = 9*Cin MXU matmul
    t = jnp.dot(wc_ref[...], x_ref[...], preferred_element_type=jnp.float32)   # [Cm, Lt]
    t = jnp.maximum(t + bc_ref[...], 0.0)

    # merged 1x1 heads: objectness + anchor deltas in a single MXU push
    h = jnp.dot(wh_ref[...], t.astype(jnp.bfloat16),
                preferred_element_type=jnp.float32) + bh_ref[...]               # [40, Lt]

    logits = jax.nn.sigmoid(h[0:G, :])                   # conv2d_bias_sigmoid (rows 3..7 unused)
    dx = h[G:2 * G, :]
    dy = h[2 * G:3 * G, :]
    dw = jnp.minimum(h[3 * G:4 * G, :], SCALE_CLAMP)
    dh = jnp.minimum(h[4 * G:5 * G, :], SCALE_CLAMP)

    anch = anch_ref[...]
    acx = anch[0:G, :]
    acy = anch[G:2 * G, :]
    aw = anch[2 * G:3 * G, :]
    ah = anch[3 * G:4 * G, :]

    # anchor decode (FPNProposal, clip_box=True) — fully lane-dense, 8-row aligned groups
    pcx = dx * aw + acx
    pcy = dy * ah + acy
    pw = jnp.exp(dw) * aw
    ph = jnp.exp(dh) * ah

    x1 = jnp.clip(pcx - 0.5 * pw, 0.0, float(IM_W))
    y1 = jnp.clip(pcy - 0.5 * ph, 0.0, float(IM_H))
    x2 = jnp.clip(pcx + 0.5 * pw, 0.0, float(IM_W))
    y2 = jnp.clip(pcy + 0.5 * ph, 0.0, float(IM_H))

    # single unmasked full-tile store (all pieces are 8-sublane-aligned vreg blocks)
    out_ref[...] = jnp.concatenate([logits, x1, y1, x2, y2], axis=0)


def fused_rpn_head_decode(x_slab, prep, anchors_slab, num_lane_blocks=1):
    # x_slab: [9*Cin, N*HWp] bf16 -> out [40, N*HWp] f32
    # num_lane_blocks=1: single fat step (right choice for v5e/v6e and for this toy size).
    # On v7x at real detector resolutions, set num_lane_blocks=2 so both TensorCores get work,
    # and size the lane tile so 9*Cin*tile*2B*2buf (+weights/anchors/out) stays under ~28-30 MiB.
    k9, nl = x_slab.shape
    lt = nl // num_lane_blocks
    assert lt * num_lane_blocks == nl and lt % 128 == 0
    return pl.pallas_call(
        fused_rpn_kernel,
        out_shape=jax.ShapeDtypeStruct((HEAD_ROWS, nl), jnp.float32),
        grid=(num_lane_blocks,),
        in_specs=[
            pl.BlockSpec((k9, lt), lambda i: (0, i)),
            pl.BlockSpec(prep["wc_T"].shape, lambda i: (0, 0)),
            pl.BlockSpec(prep["bc"].shape, lambda i: (0, 0)),
            pl.BlockSpec(prep["wh_T"].shape, lambda i: (0, 0)),
            pl.BlockSpec(prep["bh"].shape, lambda i: (0, 0)),
            pl.BlockSpec((4 * GROUP, lt), lambda i: (0, i)),
        ],
        out_specs=pl.BlockSpec((HEAD_ROWS, lt), lambda i: (0, i)),
        compiler_params=pltpu.CompilerParams(dimension_semantics=("parallel",)),
    )(x_slab, prep["wc_T"], prep["bc"], prep["wh_T"], prep["bh"], anchors_slab)


# ---------------- wrapper glue: im2col (bf16, channel-major), weight packing, anchors ----------------
def build_fused_input(features, level_names, hwp):
    # Build the im2col slab directly in [9*Cin, N*HWp] layout, in bf16, so the big 9x slab is
    # never materialized / transposed in f32 (biggest relative win on v5e's lower HBM BW).
    cols = []
    for name in level_names:
        x = features[name].astype(jnp.bfloat16)                 # cast the small raw feature first
        n, h, w, c = x.shape
        xc = jnp.transpose(x, (3, 0, 1, 2))                      # [C, N, H, W]
        xp = jnp.pad(xc, ((0, 0), (0, 0), (1, 1), (1, 1)))
        taps = [xp[:, :, dy:dy + h, dx:dx + w] for dy in range(3) for dx in range(3)]
        col = jnp.stack(taps, axis=0)                            # [9, C, N, H, W]
        cols.append(col.reshape(9 * c, n, h * w))
    slab = jnp.concatenate(cols, axis=2)                         # [9C, N, HW_total]
    slab = jnp.pad(slab, ((0, 0), (0, 0), (0, hwp - slab.shape[2])))
    return slab.reshape(slab.shape[0], -1)                       # [9C, N*HWp] (image-major lanes)


def prepare_params(params):
    # Pack PyTorch-convention weights into fused, transposed, bf16, 8-row-aligned layouts.
    A = NUM_ANCHORS
    cin = params["conv_w"].shape[2]
    cm = params["conv_w"].shape[3]
    wc_t = params["conv_w"].reshape(9 * cin, cm).T               # [Cm, 9*Cin]
    bc = params["conv_b"].reshape(cm, 1)

    reg_w = params["reg_w"].reshape(cm, A, 4)                     # [:, anchor, coord]
    reg_b = params["reg_b"].reshape(A, 4)
    wh_t = jnp.zeros((HEAD_ROWS, cm), jnp.float32)
    bh = jnp.zeros((HEAD_ROWS,), jnp.float32)
    wh_t = wh_t.at[0:A].set(params["obj_w"].T)                    # objectness rows 0..A-1
    bh = bh.at[0:A].set(params["obj_b"].reshape(A))
    for c in range(4):                                            # dx, dy, dw, dh groups
        r0 = (c + 1) * GROUP
        wh_t = wh_t.at[r0:r0 + A].set(reg_w[:, :, c].T)
        bh = bh.at[r0:r0 + A].set(reg_b[:, c])
    return dict(wc_T=wc_t.astype(jnp.bfloat16),
                bc=bc.astype(jnp.float32),
                wh_T=wh_t.astype(jnp.bfloat16),
                bh=bh.reshape(HEAD_ROWS, 1).astype(jnp.float32))


def build_anchors_concat(level_hw, hwp, n_batch):
    # Lane-dense anchors in (cx, cy, w, h) form: [32, N*HWp], 8-row groups, pixels concat
    # across levels, then tiled per image along the lane axis.
    A = NUM_ANCHORS
    cols = []
    for i, (H, W) in enumerate(level_hw):
        stride = FEAT_STRIDES[i]
        ws, hs = [], []
        for size in SIZES[i]:
            area = float(size) ** 2
            for r in RATIOS:
                bw = math.sqrt(area / r)
                ws.append(bw)
                hs.append(bw * r)
        sx = jnp.arange(W, dtype=jnp.float32) * stride
        sy = jnp.arange(H, dtype=jnp.float32) * stride
        gy, gx = jnp.meshgrid(sy, sx, indexing="ij")
        gx = gx.reshape(-1)
        gy = gy.reshape(-1)
        hw = H * W
        blk = jnp.zeros((4 * GROUP, hw), jnp.float32)
        blk = blk.at[0:A].set(jnp.broadcast_to(gx, (A, hw)))
        blk = blk.at[GROUP:GROUP + A].set(jnp.broadcast_to(gy, (A, hw)))
        blk = blk.at[2 * GROUP:2 * GROUP + A].set(
            jnp.broadcast_to(jnp.asarray(ws, jnp.float32)[:, None], (A, hw)))
        blk = blk.at[3 * GROUP:3 * GROUP + A].set(
            jnp.broadcast_to(jnp.asarray(hs, jnp.float32)[:, None], (A, hw)))
        cols.append(blk)
    cat = jnp.concatenate(cols, axis=1)                           # [32, HW_total]
    cat = jnp.pad(cat, ((0, 0), (0, hwp - cat.shape[1])))
    return jnp.tile(cat, (1, n_batch))                            # [32, N*HWp]


# ---------------- NMS (plain JAX; sequential / data-dependent) ----------------
def _iou_matrix(b):
    area = (b[:, 2] - b[:, 0]) * (b[:, 3] - b[:, 1])
    lt = jnp.maximum(b[:, None, :2], b[None, :, :2])
    rb = jnp.minimum(b[:, None, 2:], b[None, :, 2:])
    wh = jnp.clip(rb - lt, 0.0, None)
    inter = wh[..., 0] * wh[..., 1]
    union = area[:, None] + area[None, :] - inter
    return inter / jnp.maximum(union, 1e-6)


def _nms_single(boxes, scores):
    # TODO(synk): greedy NMS is inherently sequential/data-dependent; kept in plain JAX.
    # Note: suppressed slots in the fixed POST_NMS_TOPK slab are zero-filled (not dropped);
    # downstream code must tolerate all-zero rows.
    k = min(PRE_NMS_TOPK, boxes.shape[0])
    _, top_i = jax.lax.top_k(scores, k)
    b = boxes[top_i]                                  # [k, 4], score-descending
    w = b[:, 2] - b[:, 0]
    h = b[:, 3] - b[:, 1]
    keep = (w >= RPN_MIN_SIZE) & (h >= RPN_MIN_SIZE)
    iou = _iou_matrix(b)
    idx = jnp.arange(k)

    def body(i, keep):
        suppress = (iou[i] > IOU_THRESH) & (idx > i) & keep[i]
        return keep & (~suppress)

    keep = jax.lax.fori_loop(0, k, body, keep)
    order = jnp.argsort(jnp.where(keep, 0, 1), stable=True)[:POST_NMS_TOPK]
    return b[order] * keep[order][:, None].astype(b.dtype)   # [POST_NMS_TOPK, 4]


# ---------------- full RPN forward ----------------
def rpn_forward(features, prep, anchors_slab, level_names, level_meta, hwp):
    N = BATCH
    A = NUM_ANCHORS

    x_slab = build_fused_input(features, level_names, hwp)           # [9*Cin, N*HWp] bf16
    out = fused_rpn_head_decode(x_slab, prep, anchors_slab)          # [40, N*HWp] f32
    out = out.reshape(HEAD_ROWS, N, hwp)

    # Keep everything lane-dense; never transpose the full ROI slab to last-dim-4.
    scores = out[0:A]                                                # [A, N, HWp]
    boxes = jnp.stack([out[GROUP:GROUP + A],                         # x1
                       out[2 * GROUP:2 * GROUP + A],                 # y1
                       out[3 * GROUP:3 * GROUP + A],                 # x2
                       out[4 * GROUP:4 * GROUP + A]], axis=0)        # [4, A, N, HWp]

    topk_meta = [(off, hw) for off, hw in level_meta if A * hw > PRE_NMS_TOPK]
    pass_meta = [(off, hw) for off, hw in level_meta if A * hw <= PRE_NMS_TOPK]

    proposal_list, score_list = [], []

    # Vectorized per-level pre-NMS top-k: one top_k + one gather for all levels that need it.
    # TODO(synk): the per-level arg-top-k score scan could later move into the kernel epilogue.
    if topk_meta:
        maxP = max(A * hw for _, hw in topk_meta)
        sc_stack, bx_stack = [], []
        for off, hw in topk_meta:
            P = A * hw
            sc = jnp.transpose(scores[:, :, off:off + hw], (1, 0, 2)).reshape(N, P)
            sc_stack.append(jnp.pad(sc, ((0, 0), (0, maxP - P)), constant_values=-jnp.inf))
            bx = jnp.transpose(boxes[:, :, :, off:off + hw], (0, 2, 1, 3)).reshape(4, N, P)
            bx_stack.append(jnp.pad(bx, ((0, 0), (0, 0), (0, maxP - P))))
        L = len(topk_meta)
        sc_stack = jnp.stack(sc_stack, axis=0).reshape(L * N, maxP)          # [L*N, maxP]
        bx_stack = jnp.stack(bx_stack, axis=1).reshape(4, L * N, maxP)       # [4, L*N, maxP]
        top_s, top_i = jax.lax.top_k(sc_stack, PRE_NMS_TOPK)
        top_b = jnp.take_along_axis(bx_stack, top_i[None, :, :], axis=2)     # [4, L*N, K]
        top_s = top_s.reshape(L, N, PRE_NMS_TOPK)
        top_b = top_b.reshape(4, L, N, PRE_NMS_TOPK)
        score_list.append(jnp.transpose(top_s, (1, 0, 2)).reshape(N, L * PRE_NMS_TOPK))
        proposal_list.append(jnp.transpose(top_b, (2, 1, 3, 0)).reshape(N, L * PRE_NMS_TOPK, 4))

    for off, hw in pass_meta:                                                # tiny levels, kept whole
        P = A * hw
        sc = jnp.transpose(scores[:, :, off:off + hw], (1, 0, 2)).reshape(N, P)
        bx = jnp.transpose(boxes[:, :, :, off:off + hw], (2, 1, 3, 0)).reshape(N, P, 4)
        score_list.append(sc)
        proposal_list.append(bx)

    proposals = jnp.concatenate(proposal_list, axis=1)               # [N, P_total, 4]
    scores_all = jnp.concatenate(score_list, axis=1)                 # [N, P_total]
    dets = jax.vmap(_nms_single)(proposals, scores_all)              # [N, POST_NMS_TOPK, 4]

    # The reference module concatenates a constant-zero batch_inds tensor (value=0); kept as-is.
    # (If downstream needs per-image indices for BATCH>1, use broadcasted jnp.arange(N) here.)
    batch_inds = jnp.zeros((N, POST_NMS_TOPK, 1), dets.dtype)
    ret = jnp.concatenate([batch_inds, dets], axis=2).reshape(-1, 5)
    return ret, dets.reshape(-1, 4)


# ---------------- deterministic parameter init (PyTorch-convention shapes) ----------------
def init_params(key):
    ks = jax.random.split(key, 6)
    A = NUM_ANCHORS
    return dict(
        conv_w=0.01 * jax.random.normal(ks[0], (3, 3, IN_PLANES, RPN_DIM), jnp.float32),
        conv_b=0.10 * jax.random.normal(ks[1], (1, RPN_DIM), jnp.float32),
        obj_w=0.01 * jax.random.normal(ks[2], (RPN_DIM, A), jnp.float32),
        obj_b=0.10 * jax.random.normal(ks[3], (1, A), jnp.float32),
        reg_w=0.01 * jax.random.normal(ks[4], (RPN_DIM, 4 * A), jnp.float32),
        reg_b=0.10 * jax.random.normal(ks[5], (1, 4 * A), jnp.float32),
    )


if __name__ == "__main__":
    key = jax.random.PRNGKey(0)
    pkey, fkey = jax.random.split(key)
    params = init_params(pkey)
    prep = prepare_params(params)

    level_names, level_hw = [], []
    features = {}
    fkeys = jax.random.split(fkey, len(FEAT_STRIDES))
    for i, stride in enumerate(FEAT_STRIDES):
        H, W = IM_H // stride, IM_W // stride
        name = "p%d" % (i + 2)
        level_names.append(name)
        level_hw.append((H, W))
        features[name] = jax.random.normal(fkeys[i], (BATCH, H, W, IN_PLANES), jnp.float32)

    hw_total = sum(h * w for h, w in level_hw)                 # 341
    hwp = max(128, ((hw_total + 127) // 128) * 128)            # 384 (lane-dense pixel axis)
    anchors_cat = build_anchors_concat(level_hw, hwp, BATCH)   # [32, BATCH*HWp]

    level_meta, off = [], 0
    for h, w in level_hw:
        level_meta.append((off, h * w))
        off += h * w
    level_names = tuple(level_names)
    level_meta = tuple(level_meta)

    @jax.jit
    def fwd(feats, prep_, anch_):
        return rpn_forward(feats, prep_, anch_, level_names, level_meta, hwp)

    ret, dets = fwd(features, prep, anchors_cat)
    (ret, dets) = jax.block_until_ready((ret, dets))
    assert ret.shape == (BATCH * POST_NMS_TOPK, 5)
    assert dets.shape == (BATCH * POST_NMS_TOPK, 4)
    assert bool(jnp.isfinite(dets).all())
    print("KERNEL_OK")
</pallas_src>

<mosaic_0001>
module attributes {stable_mosaic.version = 11 : i64} {
  func.func @fused_rpn_kernel(%arg0: i32, %arg1: memref<576x768xbf16, #tpu.memory_space<vmem>>, %arg2: memref<64x576xbf16, #tpu.memory_space<vmem>>, %arg3: memref<64x1xf32, #tpu.memory_space<vmem>>, %arg4: memref<40x64xbf16, #tpu.memory_space<vmem>>, %arg5: memref<40x1xf32, #tpu.memory_space<vmem>>, %arg6: memref<32x768xf32, #tpu.memory_space<vmem>>, %arg7: memref<40x768xf32, #tpu.memory_space<vmem>>) attributes {dimension_semantics = [#tpu.dimension_semantics<parallel>], iteration_bounds = array<i64: 1>, scalar_prefetch = 0 : i64, scratch_operands = 0 : i64, tpu.core_type = #tpu.core_type<tc>, window_params = [{transform_indices = @transform_0, window_bounds = array<i64: 576, 768>}, {pipeline_mode = #tpu.pipeline_mode<synchronous>, transform_indices = @transform_1, window_bounds = array<i64: 64, 576>}, {pipeline_mode = #tpu.pipeline_mode<synchronous>, transform_indices = @transform_2, window_bounds = array<i64: 64, 1>}, {pipeline_mode = #tpu.pipeline_mode<synchronous>, transform_indices = @transform_3, window_bounds = array<i64: 40, 64>}, {pipeline_mode = #tpu.pipeline_mode<synchronous>, transform_indices = @transform_4, window_bounds = array<i64: 40, 1>}, {transform_indices = @transform_5, window_bounds = array<i64: 32, 768>}, {transform_indices = @transform_6, window_bounds = array<i64: 40, 768>}]} {
    %c0 = arith.constant 0 : index
    %c0_0 = arith.constant 0 : index
    %0 = vector.load %arg2[%c0, %c0_0] : memref<64x576xbf16, #tpu.memory_space<vmem>>, vector<64x576xbf16>
    %c0_1 = arith.constant 0 : index
    %c0_2 = arith.constant 0 : index
    %1 = vector.load %arg1[%c0_1, %c0_2] : memref<576x768xbf16, #tpu.memory_space<vmem>>, vector<576x768xbf16>
    %cst = arith.constant dense<0.000000e+00> : vector<64x768xf32>
    %2 = tpu.matmul %0, %1, %cst {dimension_numbers = #tpu.dot_dimension_numbers<[1], [0], [0], [1], [0, 0, 1, 1], [], []>} : vector<64x576xbf16>, vector<576x768xbf16>, vector<64x768xf32> -> vector<64x768xf32>
    %c0_3 = arith.constant 0 : index
    %c0_4 = arith.constant 0 : index
    %3 = vector.load %arg3[%c0_3, %c0_4] : memref<64x1xf32, #tpu.memory_space<vmem>>, vector<64x1xf32>
    %4 = vector.broadcast %3 : vector<64x1xf32> to vector<64x768xf32>
    %5 = arith.addf %2, %4 : vector<64x768xf32>
    %cst_5 = arith.constant 0.000000e+00 : f32
    %6 = vector.broadcast %cst_5 : f32 to vector<64x768xf32>
    %7 = arith.maximumf %5, %6 : vector<64x768xf32>
    %c0_6 = arith.constant 0 : index
    %c0_7 = arith.constant 0 : index
    %8 = vector.load %arg4[%c0_6, %c0_7] : memref<40x64xbf16, #tpu.memory_space<vmem>>, vector<40x64xbf16>
    %9 = arith.truncf %7 : vector<64x768xf32> to vector<64x768xbf16>
    %cst_8 = arith.constant dense<0.000000e+00> : vector<40x768xf32>
    %10 = tpu.matmul %8, %9, %cst_8 {dimension_numbers = #tpu.dot_dimension_numbers<[1], [0], [0], [1], [0, 0, 1, 1], [], []>} : vector<40x64xbf16>, vector<64x768xbf16>, vector<40x768xf32> -> vector<40x768xf32>
    %c0_9 = arith.constant 0 : index
    %c0_10 = arith.constant 0 : index
    %11 = vector.load %arg5[%c0_9, %c0_10] : memref<40x1xf32, #tpu.memory_space<vmem>>, vector<40x1xf32>
    %12 = vector.broadcast %11 : vector<40x1xf32> to vector<40x768xf32>
    %13 = arith.addf %10, %12 : vector<40x768xf32>
    %14 = vector.extract_strided_slice %13 {offsets = [0, 0], sizes = [8, 768], strides = [1, 1]} : vector<40x768xf32> to vector<8x768xf32>
    %15 = arith.negf %14 : vector<8x768xf32>
    %16 = math.exp %15 : vector<8x768xf32>
    %cst_11 = arith.constant 1.000000e+00 : f32
    %17 = vector.broadcast %cst_11 : f32 to vector<8x768xf32>
    %18 = arith.addf %17, %16 : vector<8x768xf32>
    %19 = arith.divf %17, %18 : vector<8x768xf32>
    %20 = vector.extract_strided_slice %13 {offsets = [8, 0], sizes = [8, 768], strides = [1, 1]} : vector<40x768xf32> to vector<8x768xf32>
    %21 = vector.extract_strided_slice %13 {offsets = [16, 0], sizes = [8, 768], strides = [1, 1]} : vector<40x768xf32> to vector<8x768xf32>
    %22 = vector.extract_strided_slice %13 {offsets = [24, 0], sizes = [8, 768], strides = [1, 1]} : vector<40x768xf32> to vector<8x768xf32>
    %cst_12 = arith.constant 4.13516665 : f32
    %23 = vector.broadcast %cst_12 : f32 to vector<8x768xf32>
    %24 = arith.minimumf %22, %23 : vector<8x768xf32>
    %25 = vector.extract_strided_slice %13 {offsets = [32, 0], sizes = [8, 768], strides = [1, 1]} : vector<40x768xf32> to vector<8x768xf32>
    %cst_13 = arith.constant 4.13516665 : f32
    %26 = vector.broadcast %cst_13 : f32 to vector<8x768xf32>
    %27 = arith.minimumf %25, %26 : vector<8x768xf32>
    %c0_14 = arith.constant 0 : index
    %c0_15 = arith.constant 0 : index
    %28 = vector.load %arg6[%c0_14, %c0_15] : memref<32x768xf32, #tpu.memory_space<vmem>>, vector<32x768xf32>
    %29 = vector.extract_strided_slice %28 {offsets = [0, 0], sizes = [8, 768], strides = [1, 1]} : vector<32x768xf32> to vector<8x768xf32>
    %30 = vector.extract_strided_slice %28 {offsets = [8, 0], sizes = [8, 768], strides = [1, 1]} : vector<32x768xf32> to vector<8x768xf32>
    %31 = vector.extract_strided_slice %28 {offsets = [16, 0], sizes = [8, 768], strides = [1, 1]} : vector<32x768xf32> to vector<8x768xf32>
    %32 = vector.extract_strided_slice %28 {offsets = [24, 0], sizes = [8, 768], strides = [1, 1]} : vector<32x768xf32> to vector<8x768xf32>
    %33 = arith.mulf %20, %31 : vector<8x768xf32>
    %34 = arith.addf %33, %29 : vector<8x768xf32>
    %35 = arith.mulf %21, %32 : vector<8x768xf32>
    %36 = arith.addf %35, %30 : vector<8x768xf32>
    %37 = math.exp %24 : vector<8x768xf32>
    %38 = arith.mulf %37, %31 : vector<8x768xf32>
    %39 = math.exp %27 : vector<8x768xf32>
    %40 = arith.mulf %39, %32 : vector<8x768xf32>
    %cst_16 = arith.constant 5.000000e-01 : f32
    %41 = vector.broadcast %cst_16 : f32 to vector<8x768xf32>
    %42 = arith.mulf %41, %38 : vector<8x768xf32>
    %43 = arith.subf %34, %42 : vector<8x768xf32>
    %cst_17 = arith.constant 0.000000e+00 : f32
    %cst_18 = arith.constant 6.400000e+01 : f32
    %44 = vector.broadcast %cst_17 : f32 to vector<8x768xf32>
    %45 = arith.maximumf %44, %43 : vector<8x768xf32>
    %46 = vector.broadcast %cst_18 : f32 to vector<8x768xf32>
    %47 = arith.minimumf %46, %45 : vector<8x768xf32>
    %cst_19 = arith.constant 5.000000e-01 : f32
    %48 = vector.broadcast %cst_19 : f32 to vector<8x768xf32>
    %49 = arith.mulf %48, %40 : vector<8x768xf32>
    %50 = arith.subf %36, %49 : vector<8x768xf32>
    %cst_20 = arith.constant 0.000000e+00 : f32
    %cst_21 = arith.constant 6.400000e+01 : f32
    %51 = vector.broadcast %cst_20 : f32 to vector<8x768xf32>
    %52 = arith.maximumf %51, %50 : vector<8x768xf32>
    %53 = vector.broadcast %cst_21 : f32 to vector<8x768xf32>
    %54 = arith.minimumf %53, %52 : vector<8x768xf32>
    %cst_22 = arith.constant 5.000000e-01 : f32
    %55 = vector.broadcast %cst_22 : f32 to vector<8x768xf32>
    %56 = arith.mulf %55, %38 : vector<8x768xf32>
    %57 = arith.addf %34, %56 : vector<8x768xf32>
    %cst_23 = arith.constant 0.000000e+00 : f32
    %cst_24 = arith.constant 6.400000e+01 : f32
    %58 = vector.broadcast %cst_23 : f32 to vector<8x768xf32>
    %59 = arith.maximumf %58, %57 : vector<8x768xf32>
    %60 = vector.broadcast %cst_24 : f32 to vector<8x768xf32>
    %61 = arith.minimumf %60, %59 : vector<8x768xf32>
    %cst_25 = arith.constant 5.000000e-01 : f32
    %62 = vector.broadcast %cst_25 : f32 to vector<8x768xf32>
    %63 = arith.mulf %62, %40 : vector<8x768xf32>
    %64 = arith.addf %36, %63 : vector<8x768xf32>
    %cst_26 = arith.constant 0.000000e+00 : f32
    %cst_27 = arith.constant 6.400000e+01 : f32
    %65 = vector.broadcast %cst_26 : f32 to vector<8x768xf32>
    %66 = arith.maximumf %65, %64 : vector<8x768xf32>
    %67 = vector.broadcast %cst_27 : f32 to vector<8x768xf32>
    %68 = arith.minimumf %67, %66 : vector<8x768xf32>
    %69 = tpu.concatenate %19, %47, %54, %61, %68 in 0 : vector<8x768xf32>, vector<8x768xf32>, vector<8x768xf32>, vector<8x768xf32>, vector<8x768xf32> -> vector<40x768xf32>
    %c0_28 = arith.constant 0 : index
    %c0_29 = arith.constant 0 : index
    %70 = vector.load %arg7[%c0_28, %c0_29] : memref<40x768xf32, #tpu.memory_space<vmem>>, vector<40x768xf32>
    tpu.vector_store %arg7[%c0_28, %c0_29], %69 {strides = array<i32>} : memref<40x768xf32, #tpu.memory_space<vmem>>, vector<40x768xf32>,
    return
  }
  func.func @transform_0(%arg0: i32) -> (i32, i32) {
    %c0_i32 = arith.constant 0 : i32
    %c0_i32_0 = arith.constant 0 : i32
    return %c0_i32, %arg0 : i32, i32
  }
  func.func @transform_1(%arg0: i32) -> (i32, i32) {
    %c0_i32 = arith.constant 0 : i32
    %c0_i32_0 = arith.constant 0 : i32
    %c0_i32_1 = arith.constant 0 : i32
    return %c0_i32, %c0_i32_0 : i32, i32
  }
  func.func @transform_2(%arg0: i32) -> (i32, i32) {
    %c0_i32 = arith.constant 0 : i32
    %c0_i32_0 = arith.constant 0 : i32
    %c0_i32_1 = arith.constant 0 : i32
    return %c0_i32, %c0_i32_0 : i32, i32
  }
  func.func @transform_3(%arg0: i32) -> (i32, i32) {
    %c0_i32 = arith.constant 0 : i32
    %c0_i32_0 = arith.constant 0 : i32
    %c0_i32_1 = arith.constant 0 : i32
    return %c0_i32, %c0_i32_0 : i32, i32
  }
  func.func @transform_4(%arg0: i32) -> (i32, i32) {
    %c0_i32 = arith.constant 0 : i32
    %c0_i32_0 = arith.constant 0 : i32
    %c0_i32_1 = arith.constant 0 : i32
    return %c0_i32, %c0_i32_0 : i32, i32
  }
  func.func @transform_5(%arg0: i32) -> (i32, i32) {
    %c0_i32 = arith.constant 0 : i32
    %c0_i32_0 = arith.constant 0 : i32
    return %c0_i32, %arg0 : i32, i32
  }
  func.func @transform_6(%arg0: i32) -> (i32, i32) {
    %c0_i32 = arith.constant 0 : i32
    %c0_i32_0 = arith.constant 0 : i32
    return %c0_i32, %arg0 : i32, i32
  }
}

</mosaic_0001>

<llo_original>
// kernel: fwd.1
$region0: #{fwd.1}
  #allocation0 [shape = 'u32[]', space=smem, size = 0x4, offset = 0x4, fixed_abs, tag = 'smem constant byte address 0x4 - core index']
  #allocation1 [shape = 'u32[72,128]{1,0:T(1,128)}', space=vmem, size = 0x9000, scoped, tag = 'internal scratch']
  %s0 = inlined_call_operand.vmem [shape: bf16[576,768], index: 0, kind: input, shape index: {}]
  %s1 = inlined_call_operand.vmem [shape: bf16[64,576], index: 1, kind: input, shape index: {}]
  %s2 = inlined_call_operand.vmem [shape: f32[64,1], index: 2, kind: input, shape index: {}]
  %s3 = inlined_call_operand.vmem [shape: bf16[40,64], index: 3, kind: input, shape index: {}]
  %s4 = inlined_call_operand.vmem [shape: f32[40,1], index: 4, kind: input, shape index: {}]
  %s5 = inlined_call_operand.vmem [shape: f32[32,768], index: 5, kind: input, shape index: {}]
  %s6 = inlined_call_operand.vmem [shape: f32[40,768], index: 6, kind: output, shape index: {}]
  %s7 = sld [smem:[#allocation0]]
  $region34: #{fwd.1} parent=0
    _
  %s9 = ssub.s32 1, %s7
  %s10 = scalar_select 0, %s9, %s7
  // Predicated region
  $region2: #{fwd.1} parent=0 // pred_check
    _
  $region3: #{fwd.1} parent=0 // pred_check_branch
    %12 = sbr.rel (0) target = $region5
  $region4: #{fwd.1} parent=0 // pred_region
    _
  $region5: #{fwd.1} parent=0 // pred_fallthru
    _
  // Predicated region
  $region6: #{fwd.1} parent=0 // pred_check
    _
  $region7: #{fwd.1} parent=0 // pred_check_branch
    %14 = sbr.rel (0) target = $region9
  $region8: #{fwd.1} parent=0 // pred_region
    _
  $region9: #{fwd.1} parent=0 // pred_fallthru
    _
  // Predicated region
  $region10: #{fwd.1} parent=0 // pred_check
    _
  $region11: #{fwd.1} parent=0 // pred_check_branch
    %16 = sbr.rel (0) target = $region13
  $region12: #{fwd.1} parent=0 // pred_region
    _
  $region13: #{fwd.1} parent=0 // pred_fallthru
    _
  // Predicated region
  $region14: #{fwd.1} parent=0 // pred_check
    _
  $region15: #{fwd.1} parent=0 // pred_check_branch
    %18 = sbr.rel (0) target = $region17
  $region16: #{fwd.1} parent=0 // pred_region
    _
  $region17: #{fwd.1} parent=0 // pred_fallthru
    _
  // Predicated region
  $region18: #{fwd.1} parent=0 // pred_check
    _
  $region19: #{fwd.1} parent=0 // pred_check_branch
    %20 = sbr.rel (0) target = $region21
  $region20: #{fwd.1} parent=0 // pred_region
    _
  $region21: #{fwd.1} parent=0 // pred_fallthru
    _
  // Predicated region
  $region22: #{fwd.1} parent=0 // pred_check
    _
  $region23: #{fwd.1} parent=0 // pred_check_branch
    %22 = sbr.rel (0) target = $region25
  $region24: #{fwd.1} parent=0 // pred_region
    _
  $region25: #{fwd.1} parent=0 // pred_fallthru
    _
  %v24 = vld [vmem:[%s1] sm:$0xff]
  %v25 = vld [vmem:[%s1 + $0x8] sm:$0xff]
  %v26 = vld [vmem:[%s1 + $0x10] sm:$0xf]
  %v27 = vld [vmem:[%s1 + $0x14] sm:$0xff]
  %v28 = vld [vmem:[%s1 + $0x1c] sm:$0xff]
  %v29 = vld [vmem:[%s1 + $0x24] sm:$0xf]
  %v30 = vld [vmem:[%s1 + $0x28] sm:$0xff]
  %v31 = vld [vmem:[%s1 + $0x30] sm:$0xff]
  %v32 = vld [vmem:[%s1 + $0x38] sm:$0xf]
  %v33 = vld [vmem:[%s1 + $0x3c] sm:$0xff]
  %v34 = vld [vmem:[%s1 + $0x44] sm:$0xff]
  %v35 = vld [vmem:[%s1 + $0x4c] sm:$0xf]
  %v36 = vld [vmem:[%s1 + $0x50] sm:$0xff]
  %v37 = vld [vmem:[%s1 + $0x58] sm:$0xff]
  %v38 = vld [vmem:[%s1 + $0x60] sm:$0xf]
  %v39 = vld [vmem:[%s1 + $0x64] sm:$0xff]
  %v40 = vld [vmem:[%s1 + $0x6c] sm:$0xff]
  %v41 = vld [vmem:[%s1 + $0x74] sm:$0xf]
  %v42 = vld [vmem:[%s1 + $0x78] sm:$0xff]
  %v43 = vld [vmem:[%s1 + $0x80] sm:$0xff]
  %v44 = vld [vmem:[%s1 + $0x88] sm:$0xf]
  %v45 = vld [vmem:[%s1 + $0x8c] sm:$0xff]
  %v46 = vld [vmem:[%s1 + $0x94] sm:$0xff]
  %v47 = vld [vmem:[%s1 + $0x9c] sm:$0xf]
  %v48 = vld [vmem:[%s0] sm:$0xff]
  %v49 = vld [vmem:[%s0 + $0x8] sm:$0xff]
  %v50 = vld [vmem:[%s0 + $0x10] sm:$0xff]
  %v51 = vld [vmem:[%s0 + $0x18] sm:$0xff]
  %v52 = vld [vmem:[%s0 + $0x20] sm:$0xff]
  %v53 = vld [vmem:[%s0 + $0x28] sm:$0xff]
  %v54 = vld [vmem:[%s0 + $0x30] sm:$0xff]
  %v55 = vld [vmem:[%s0 + $0x38] sm:$0xff]
  %v56 = vld [vmem:[%s0 + $0x40] sm:$0xff]
  %v57 = vld [vmem:[%s0 + $0x48] sm:$0xff]
  %v58 = vld [vmem:[%s0 + $0x50] sm:$0xff]
  %v59 = vld [vmem:[%s0 + $0x58] sm:$0xff]
  %v60 = vld [vmem:[%s0 + $0x60] sm:$0xff]
  %v61 = vld [vmem:[%s0 + $0x68] sm:$0xff]
  %v62 = vld [vmem:[%s0 + $0x70] sm:$0xff]
  %v63 = vld [vmem:[%s0 + $0x78] sm:$0xff]
  %v64 = vld [vmem:[%s0 + $0x80] sm:$0xff]
  %v65 = vld [vmem:[%s0 + $0x88] sm:$0xff]
  %v66 = vld [vmem:[%s0 + $0x90] sm:$0xff]
  %v67 = vld [vmem:[%s0 + $0x98] sm:$0xff]
  %v68 = vld [vmem:[%s0 + $0xa0] sm:$0xff]
  %v69 = vld [vmem:[%s0 + $0xa8] sm:$0xff]
  %v70 = vld [vmem:[%s0 + $0xb0] sm:$0xff]
  %v71 = vld [vmem:[%s0 + $0xb8] sm:$0xff]
  %v72 = vld [vmem:[%s0 + $0xc0] sm:$0xff]
  %v73 = vld [vmem:[%s0 + $0xc8] sm:$0xff]
  %v74 = vld [vmem:[%s0 + $0xd0] sm:$0xff]
  %v75 = vld [vmem:[%s0 + $0xd8] sm:$0xff]
  %v76 = vld [vmem:[%s0 + $0xe0] sm:$0xff]
  %v77 = vld [vmem:[%s0 + $0xe8] sm:$0xff]
  %v78 = vld [vmem:[%s0 + $0xf0] sm:$0xff]
  %v79 = vld [vmem:[%s0 + $0xf8] sm:$0xff]
  %v80 = vld [vmem:[%s0 + $0x100] sm:$0xff]
  %v81 = vld [vmem:[%s0 + $0x108] sm:$0xff]
  %v82 = vld [vmem:[%s0 + $0x110] sm:$0xff]
  %v83 = vld [vmem:[%s0 + $0x118] sm:$0xff]
  %v84 = vld [vmem:[%s0 + $0x120] sm:$0xff]
  %v85 = vld [vmem:[%s0 + $0x128] sm:$0xff]
  %v86 = vld [vmem:[%s0 + $0x130] sm:$0xff]
  %v87 = vld [vmem:[%s0 + $0x138] sm:$0xff]
  %v88 = vld [vmem:[%s0 + $0x140] sm:$0xff]
  %v89 = vld [vmem:[%s0 + $0x148] sm:$0xff]
  %v90 = vld [vmem:[%s0 + $0x150] sm:$0xff]
  %v91 = vld [vmem:[%s0 + $0x158] sm:$0xff]
  %v92 = vld [vmem:[%s0 + $0x160] sm:$0xff]
  %v93 = vld [vmem:[%s0 + $0x168] sm:$0xff]
  %v94 = vld [vmem:[%s0 + $0x170] sm:$0xff]
  %v95 = vld [vmem:[%s0 + $0x178] sm:$0xff]
  %v96 = vld [vmem:[%s0 + $0x180] sm:$0xff]
  %v97 = vld [vmem:[%s0 + $0x188] sm:$0xff]
  %v98 = vld [vmem:[%s0 + $0x190] sm:$0xff]
  %v99 = vld [vmem:[%s0 + $0x198] sm:$0xff]
  %v100 = vld [vmem:[%s0 + $0x1a0] sm:$0xff]
  %v101 = vld [vmem:[%s0 + $0x1a8] sm:$0xff]
  %v102 = vld [vmem:[%s0 + $0x1b0] sm:$0xff]
  %v103 = vld [vmem:[%s0 + $0x1b8] sm:$0xff]
  %v104 = vld [vmem:[%s0 + $0x1c0] sm:$0xff]
  %v105 = vld [vmem:[%s0 + $0x1c8] sm:$0xff]
  %v106 = vld [vmem:[%s0 + $0x1d0] sm:$0xff]
  %v107 = vld [vmem:[%s0 + $0x1d8] sm:$0xff]
  %v108 = vld [vmem:[%s0 + $0x1e0] sm:$0xff]
  %v109 = vld [vmem:[%s0 + $0x1e8] sm:$0xff]
  %v110 = vld [vmem:[%s0 + $0x1f0] sm:$0xff]
  %v111 = vld [vmem:[%s0 + $0x1f8] sm:$0xff]
  %v112 = vld [vmem:[%s0 + $0x200] sm:$0xff]
  %v113 = vld [vmem:[%s0 + $0x208] sm:$0xff]
  %v114 = vld [vmem:[%s0 + $0x210] sm:$0xff]
  %v115 = vld [vmem:[%s0 + $0x218] sm:$0xff]
  %v116 = vld [vmem:[%s0 + $0x220] sm:$0xff]
  %v117 = vld [vmem:[%s0 + $0x228] sm:$0xff]
  %v118 = vld [vmem:[%s0 + $0x230] sm:$0xff]
  %v119 = vld [vmem:[%s0 + $0x238] sm:$0xff]
  %v120 = vld [vmem:[%s0 + $0x240] sm:$0xff]
  %v121 = vld [vmem:[%s0 + $0x248] sm:$0xff]
  %v122 = vld [vmem:[%s0 + $0x250] sm:$0xff]
  %v123 = vld [vmem:[%s0 + $0x258] sm:$0xff]
  %v124 = vld [vmem:[%s0 + $0x260] sm:$0xff]
  %v125 = vld [vmem:[%s0 + $0x268] sm:$0xff]
  %v126 = vld [vmem:[%s0 + $0x270] sm:$0xff]
  %v127 = vld [vmem:[%s0 + $0x278] sm:$0xff]
  %v128 = vld [vmem:[%s0 + $0x280] sm:$0xff]
  %v129 = vld [vmem:[%s0 + $0x288] sm:$0xff]
  %v130 = vld [vmem:[%s0 + $0x290] sm:$0xff]
  %v131 = vld [vmem:[%s0 + $0x298] sm:$0xff]
  %v132 = vld [vmem:[%s0 + $0x2a0] sm:$0xff]
  %v133 = vld [vmem:[%s0 + $0x2a8] sm:$0xff]
  %v134 = vld [vmem:[%s0 + $0x2b0] sm:$0xff]
  %v135 = vld [vmem:[%s0 + $0x2b8] sm:$0xff]
  %v136 = vld [vmem:[%s0 + $0x2c0] sm:$0xff]
  %v137 = vld [vmem:[%s0 + $0x2c8] sm:$0xff]
  %v138 = vld [vmem:[%s0 + $0x2d0] sm:$0xff]
  %v139 = vld [vmem:[%s0 + $0x2d8] sm:$0xff]
  %v140 = vld [vmem:[%s0 + $0x2e0] sm:$0xff]
  %v141 = vld [vmem:[%s0 + $0x2e8] sm:$0xff]
  %v142 = vld [vmem:[%s0 + $0x2f0] sm:$0xff]
  %v143 = vld [vmem:[%s0 + $0x2f8] sm:$0xff]
  %v144 = vld [vmem:[%s0 + $0x300] sm:$0xff]
  %v145 = vld [vmem:[%s0 + $0x308] sm:$0xff]
  %v146 = vld [vmem:[%s0 + $0x310] sm:$0xff]
  %v147 = vld [vmem:[%s0 + $0x318] sm:$0xff]
  %v148 = vld [vmem:[%s0 + $0x320] sm:$0xff]
  %v149 = vld [vmem:[%s0 + $0x328] sm:$0xff]
  %v150 = vld [vmem:[%s0 + $0x330] sm:$0xff]
  %v151 = vld [vmem:[%s0 + $0x338] sm:$0xff]
  %v152 = vld [vmem:[%s0 + $0x340] sm:$0xff]
  %v153 = vld [vmem:[%s0 + $0x348] sm:$0xff]
  %v154 = vld [vmem:[%s0 + $0x350] sm:$0xff]
  %v155 = vld [vmem:[%s0 + $0x358] sm:$0xff]
  %v156 = vld [vmem:[%s0 + $0x360] sm:$0xff]
  %v157 = vld [vmem:[%s0 + $0x368] sm:$0xff]
  %v158 = vld [vmem:[%s0 + $0x370] sm:$0xff]
  %v159 = vld [vmem:[%s0 + $0x378] sm:$0xff]
  %v160 = vld [vmem:[%s0 + $0x380] sm:$0xff]
  %v161 = vld [vmem:[%s0 + $0x388] sm:$0xff]
  %v162 = vld [vmem:[%s0 + $0x390] sm:$0xff]
  %v163 = vld [vmem:[%s0 + $0x398] sm:$0xff]
  %v164 = vld [vmem:[%s0 + $0x3a0] sm:$0xff]
  %v165 = vld [vmem:[%s0 + $0x3a8] sm:$0xff]
  %v166 = vld [vmem:[%s0 + $0x3b0] sm:$0xff]
  %v167 = vld [vmem:[%s0 + $0x3b8] sm:$0xff]
  %v168 = vld [vmem:[%s0 + $0x3c0] sm:$0xff]
  %v169 = vld [vmem:[%s0 + $0x3c8] sm:$0xff]
  %v170 = vld [vmem:[%s0 + $0x3d0] sm:$0xff]
  %v171 = vld [vmem:[%s0 + $0x3d8] sm:$0xff]
  %v172 = vld [vmem:[%s0 + $0x3e0] sm:$0xff]
  %v173 = vld [vmem:[%s0 + $0x3e8] sm:$0xff]
  %v174 = vld [vmem:[%s0 + $0x3f0] sm:$0xff]
  %v175 = vld [vmem:[%s0 + $0x3f8] sm:$0xff]
  %v176 = vld [vmem:[%s0 + $0x400] sm:$0xff]
  %v177 = vld [vmem:[%s0 + $0x408] sm:$0xff]
  %v178 = vld [vmem:[%s0 + $0x410] sm:$0xff]
  %v179 = vld [vmem:[%s0 + $0x418] sm:$0xff]
  %v180 = vld [vmem:[%s0 + $0x420] sm:$0xff]
  %v181 = vld [vmem:[%s0 + $0x428] sm:$0xff]
  %v182 = vld [vmem:[%s0 + $0x430] sm:$0xff]
  %v183 = vld [vmem:[%s0 + $0x438] sm:$0xff]
  %v184 = vld [vmem:[%s0 + $0x440] sm:$0xff]
  %v185 = vld [vmem:[%s0 + $0x448] sm:$0xff]
  %v186 = vld [vmem:[%s0 + $0x450] sm:$0xff]
  %v187 = vld [vmem:[%s0 + $0x458] sm:$0xff]
  %v188 = vld [vmem:[%s0 + $0x460] sm:$0xff]
  %v189 = vld [vmem:[%s0 + $0x468] sm:$0xff]
  %v190 = vld [vmem:[%s0 + $0x470] sm:$0xff]
  %v191 = vld [vmem:[%s0 + $0x478] sm:$0xff]
  %v192 = vld [vmem:[%s0 + $0x480] sm:$0xff]
  %v193 = vld [vmem:[%s0 + $0x488] sm:$0xff]
  %v194 = vld [vmem:[%s0 + $0x490] sm:$0xff]
  %v195 = vld [vmem:[%s0 + $0x498] sm:$0xff]
  %v196 = vld [vmem:[%s0 + $0x4a0] sm:$0xff]
  %v197 = vld [vmem:[%s0 + $0x4a8] sm:$0xff]
  %v198 = vld [vmem:[%s0 + $0x4b0] sm:$0xff]
  %v199 = vld [vmem:[%s0 + $0x4b8] sm:$0xff]
  %v200 = vld [vmem:[%s0 + $0x4c0] sm:$0xff]
  %v201 = vld [vmem:[%s0 + $0x4c8] sm:$0xff]
  %v202 = vld [vmem:[%s0 + $0x4d0] sm:$0xff]
  %v203 = vld [vmem:[%s0 + $0x4d8] sm:$0xff]
  %v204 = vld [vmem:[%s0 + $0x4e0] sm:$0xff]
  %v205 = vld [vmem:[%s0 + $0x4e8] sm:$0xff]
  %v206 = vld [vmem:[%s0 + $0x4f0] sm:$0xff]
  %v207 = vld [vmem:[%s0 + $0x4f8] sm:$0xff]
  %v208 = vld [vmem:[%s0 + $0x500] sm:$0xff]
  %v209 = vld [vmem:[%s0 + $0x508] sm:$0xff]
  %v210 = vld [vmem:[%s0 + $0x510] sm:$0xff]
  %v211 = vld [vmem:[%s0 + $0x518] sm:$0xff]
  %v212 = vld [vmem:[%s0 + $0x520] sm:$0xff]
  %v213 = vld [vmem:[%s0 + $0x528] sm:$0xff]
  %v214 = vld [vmem:[%s0 + $0x530] sm:$0xff]
  %v215 = vld [vmem:[%s0 + $0x538] sm:$0xff]
  %v216 = vld [vmem:[%s0 + $0x540] sm:$0xff]
  %v217 = vld [vmem:[%s0 + $0x548] sm:$0xff]
  %v218 = vld [vmem:[%s0 + $0x550] sm:$0xff]
  %v219 = vld [vmem:[%s0 + $0x558] sm:$0xff]
  %v220 = vld [vmem:[%s0 + $0x560] sm:$0xff]
  %v221 = vld [vmem:[%s0 + $0x568] sm:$0xff]
  %v222 = vld [vmem:[%s0 + $0x570] sm:$0xff]
  %v223 = vld [vmem:[%s0 + $0x578] sm:$0xff]
  %v224 = vld [vmem:[%s0 + $0x580] sm:$0xff]
  %v225 = vld [vmem:[%s0 + $0x588] sm:$0xff]
  %v226 = vld [vmem:[%s0 + $0x590] sm:$0xff]
  %v227 = vld [vmem:[%s0 + $0x598] sm:$0xff]
  %v228 = vld [vmem:[%s0 + $0x5a0] sm:$0xff]
  %v229 = vld [vmem:[%s0 + $0x5a8] sm:$0xff]
  %v230 = vld [vmem:[%s0 + $0x5b0] sm:$0xff]
  %v231 = vld [vmem:[%s0 + $0x5b8] sm:$0xff]
  %v232 = vld [vmem:[%s0 + $0x5c0] sm:$0xff]
  %v233 = vld [vmem:[%s0 + $0x5c8] sm:$0xff]
  %v234 = vld [vmem:[%s0 + $0x5d0] sm:$0xff]
  %v235 = vld [vmem:[%s0 + $0x5d8] sm:$0xff]
  %v236 = vld [vmem:[%s0 + $0x5e0] sm:$0xff]
  %v237 = vld [vmem:[%s0 + $0x5e8] sm:$0xff]
  %v238 = vld [vmem:[%s0 + $0x5f0] sm:$0xff]
  %v239 = vld [vmem:[%s0 + $0x5f8] sm:$0xff]
  %v240 = vld [vmem:[%s0 + $0x600] sm:$0xff]
  %v241 = vld [vmem:[%s0 + $0x608] sm:$0xff]
  %v242 = vld [vmem:[%s0 + $0x610] sm:$0xff]
  %v243 = vld [vmem:[%s0 + $0x618] sm:$0xff]
  %v244 = vld [vmem:[%s0 + $0x620] sm:$0xff]
  %v245 = vld [vmem:[%s0 + $0x628] sm:$0xff]
  %v246 = vld [vmem:[%s0 + $0x630] sm:$0xff]
  %v247 = vld [vmem:[%s0 + $0x638] sm:$0xff]
  %v248 = vld [vmem:[%s0 + $0x640] sm:$0xff]
  %v249 = vld [vmem:[%s0 + $0x648] sm:$0xff]
  %v250 = vld [vmem:[%s0 + $0x650] sm:$0xff]
  %v251 = vld [vmem:[%s0 + $0x658] sm:$0xff]
  %v252 = vld [vmem:[%s0 + $0x660] sm:$0xff]
  %v253 = vld [vmem:[%s0 + $0x668] sm:$0xff]
  %v254 = vld [vmem:[%s0 + $0x670] sm:$0xff]
  %v255 = vld [vmem:[%s0 + $0x678] sm:$0xff]
  %v256 = vld [vmem:[%s0 + $0x680] sm:$0xff]
  %v257 = vld [vmem:[%s0 + $0x688] sm:$0xff]
  %v258 = vld [vmem:[%s0 + $0x690] sm:$0xff]
  %v259 = vld [vmem:[%s0 + $0x698] sm:$0xff]
  %v260 = vld [vmem:[%s0 + $0x6a0] sm:$0xff]
  %v261 = vld [vmem:[%s0 + $0x6a8] sm:$0xff]
  %v262 = vld [vmem:[%s0 + $0x6b0] sm:$0xff]
  %v263 = vld [vmem:[%s0 + $0x6b8] sm:$0xff]
  %v264 = vld [vmem:[%s2] sm:$0xff]
  %v265 = vld [vmem:[%s2 + $0x8] sm:$0xff]
  %v266 = vld [vmem:[%s2 + $0x10] sm:$0xff]
  %v267 = vld [vmem:[%s2 + $0x18] sm:$0xff]
  %v268 = vld [vmem:[%s2 + $0x20] sm:$0xff]
  %v269 = vld [vmem:[%s2 + $0x28] sm:$0xff]
  %v270 = vld [vmem:[%s2 + $0x30] sm:$0xff]
  %v271 = vld [vmem:[%s2 + $0x38] sm:$0xff]
  %273 = vset.pattern.permute.xlu0 0
  %274 = vperm.xlu0 %273, %v264
  %v275 = vpop.permute.xlu0 %274
  %278 = vset.pattern.permute.xlu0 0
  %279 = vperm.xlu0 %278, %v265
  %v280 = vpop.permute.xlu0 %279
  %283 = vset.pattern.permute.xlu0 0
  %284 = vperm.xlu0 %283, %v266
  %v285 = vpop.permute.xlu0 %284
  %288 = vset.pattern.permute.xlu0 0
  %289 = vperm.xlu0 %288, %v267
  %v290 = vpop.permute.xlu0 %289
  %293 = vset.pattern.permute.xlu0 0
  %294 = vperm.xlu0 %293, %v268
  %v295 = vpop.permute.xlu0 %294
  %298 = vset.pattern.permute.xlu0 0
  %299 = vperm.xlu0 %298, %v269
  %v300 = vpop.permute.xlu0 %299
  %303 = vset.pattern.permute.xlu0 0
  %304 = vperm.xlu0 %303, %v270
  %v305 = vpop.permute.xlu0 %304
  %308 = vset.pattern.permute.xlu0 0
  %309 = vperm.xlu0 %308, %v271
  %v310 = vpop.permute.xlu0 %309
  %v336 = vunpack.c.l.b16 %v24
  %v337 = vunpack.c.h.b16 %v24
  %v338 = vunpack.c.l.b16 %v25
  %v339 = vunpack.c.h.b16 %v25
  %v340 = vunpack.c.l.b16 %v26
  %v341 = vunpack.c.l.b16 %v27
  %v342 = vunpack.c.h.b16 %v27
  %v343 = vunpack.c.l.b16 %v28
  %v344 = vunpack.c.h.b16 %v28
  %v345 = vunpack.c.l.b16 %v29
  %v346 = vunpack.c.l.b16 %v30
  %v347 = vunpack.c.h.b16 %v30
  %v348 = vunpack.c.l.b16 %v31
  %v349 = vunpack.c.h.b16 %v31
  %v350 = vunpack.c.l.b16 %v32
  %v351 = vunpack.c.l.b16 %v33
  %v352 = vunpack.c.h.b16 %v33
  %v353 = vunpack.c.l.b16 %v34
  %v354 = vunpack.c.h.b16 %v34
  %v355 = vunpack.c.l.b16 %v35
  %v356 = vunpack.c.l.b16 %v36
  %v357 = vunpack.c.h.b16 %v36
  %v358 = vunpack.c.l.b16 %v37
  %v359 = vunpack.c.h.b16 %v37
  %v360 = vunpack.c.l.b16 %v38
  %v361 = vunpack.c.l.b16 %v39
  %v362 = vunpack.c.h.b16 %v39
  %v363 = vunpack.c.l.b16 %v40
  %v364 = vunpack.c.h.b16 %v40
  %v365 = vunpack.c.l.b16 %v41
  %v366 = vunpack.c.l.b16 %v42
  %v367 = vunpack.c.h.b16 %v42
  %v368 = vunpack.c.l.b16 %v43
  %v369 = vunpack.c.h.b16 %v43
  %v370 = vunpack.c.l.b16 %v44
  %v371 = vunpack.c.l.b16 %v45
  %v372 = vunpack.c.h.b16 %v45
  %v373 = vunpack.c.l.b16 %v46
  %v374 = vunpack.c.h.b16 %v46
  %v375 = vunpack.c.l.b16 %v47
  %v376 = vpack.c.b16 %v341, %v336
  %v377 = vpack.c.b16 %v342, %v337
  %v378 = vpack.c.b16 %v343, %v338
  %v379 = vpack.c.b16 %v344, %v339
  %v380 = vpack.c.b16 %v345, %v340
  %v381 = vpack.c.b16 %v351, %v346
  %v382 = vpack.c.b16 %v352, %v347
  %v383 = vpack.c.b16 %v353, %v348
  %v384 = vpack.c.b16 %v354, %v349
  %v385 = vpack.c.b16 %v355, %v350
  %v386 = vpack.c.b16 %v361, %v356
  %v387 = vpack.c.b16 %v362, %v357
  %v388 = vpack.c.b16 %v363, %v358
  %v389 = vpack.c.b16 %v364, %v359
  %v390 = vpack.c.b16 %v365, %v360
  %v391 = vpack.c.b16 %v371, %v366
  %v392 = vpack.c.b16 %v372, %v367
  %v393 = vpack.c.b16 %v373, %v368
  %v394 = vpack.c.b16 %v374, %v369
  %v395 = vpack.c.b16 %v375, %v370
  %v628 = vunpack.c.l.b16 %v48
  %v629 = vunpack.c.h.b16 %v48
  %v630 = vunpack.c.l.b16 %v49
  %v631 = vunpack.c.h.b16 %v49
  %v632 = vunpack.c.l.b16 %v50
  %v633 = vunpack.c.h.b16 %v50
  %v634 = vunpack.c.l.b16 %v51
  %v635 = vunpack.c.h.b16 %v51
  %v636 = vunpack.c.l.b16 %v52
  %v637 = vunpack.c.h.b16 %v52
  %v638 = vunpack.c.l.b16 %v53
  %v639 = vunpack.c.h.b16 %v53
  %v640 = vunpack.c.l.b16 %v54
  %v641 = vunpack.c.h.b16 %v54
  %v642 = vunpack.c.l.b16 %v55
  %v643 = vunpack.c.h.b16 %v55
  %v644 = vunpack.c.l.b16 %v56
  %v645 = vunpack.c.h.b16 %v56
  %v646 = vunpack.c.l.b16 %v57
  %v647 = vunpack.c.h.b16 %v57
  %v648 = vunpack.c.l.b16 %v58
  %v649 = vunpack.c.h.b16 %v58
  %v650 = vunpack.c.l.b16 %v59
  %v651 = vunpack.c.h.b16 %v59
  %v652 = vunpack.c.l.b16 %v60
  %v653 = vunpack.c.h.b16 %v60
  %v654 = vunpack.c.l.b16 %v61
  %v655 = vunpack.c.h.b16 %v61
  %v656 = vunpack.c.l.b16 %v62
  %v657 = vunpack.c.h.b16 %v62
  %v658 = vunpack.c.l.b16 %v63
  %v659 = vunpack.c.h.b16 %v63
  %v660 = vunpack.c.l.b16 %v64
  %v661 = vunpack.c.h.b16 %v64
  %v662 = vunpack.c.l.b16 %v65
  %v663 = vunpack.c.h.b16 %v65
  %v664 = vunpack.c.l.b16 %v66
  %v665 = vunpack.c.h.b16 %v66
  %v666 = vunpack.c.l.b16 %v67
  %v667 = vunpack.c.h.b16 %v67
  %v668 = vunpack.c.l.b16 %v68
  %v669 = vunpack.c.h.b16 %v68
  %v670 = vunpack.c.l.b16 %v69
  %v671 = vunpack.c.h.b16 %v69
  %v672 = vunpack.c.l.b16 %v70
  %v673 = vunpack.c.h.b16 %v70
  %v674 = vunpack.c.l.b16 %v71
  %v675 = vunpack.c.h.b16 %v71
  %v676 = vunpack.c.l.b16 %v72
  %v677 = vunpack.c.h.b16 %v72
  %v678 = vunpack.c.l.b16 %v73
  %v679 = vunpack.c.h.b16 %v73
  %v680 = vunpack.c.l.b16 %v74
  %v681 = vunpack.c.h.b16 %v74
  %v682 = vunpack.c.l.b16 %v75
  %v683 = vunpack.c.h.b16 %v75
  %v684 = vunpack.c.l.b16 %v76
  %v685 = vunpack.c.h.b16 %v76
  %v686 = vunpack.c.l.b16 %v77
  %v687 = vunpack.c.h.b16 %v77
  %v688 = vunpack.c.l.b16 %v78
  %v689 = vunpack.c.h.b16 %v78
  %v690 = vunpack.c.l.b16 %v79
  %v691 = vunpack.c.h.b16 %v79
  %v692 = vunpack.c.l.b16 %v80
  %v693 = vunpack.c.h.b16 %v80
  %v694 = vunpack.c.l.b16 %v81
  %v695 = vunpack.c.h.b16 %v81
  %v696 = vunpack.c.l.b16 %v82
  %v697 = vunpack.c.h.b16 %v82
  %v698 = vunpack.c.l.b16 %v83
  %v699 = vunpack.c.h.b16 %v83
  %v700 = vunpack.c.l.b16 %v84
  %v701 = vunpack.c.h.b16 %v84
  %v702 = vunpack.c.l.b16 %v85
  %v703 = vunpack.c.h.b16 %v85
  %v704 = vunpack.c.l.b16 %v86
  %v705 = vunpack.c.h.b16 %v86
  %v706 = vunpack.c.l.b16 %v87
  %v707 = vunpack.c.h.b16 %v87
  %v708 = vunpack.c.l.b16 %v88
  %v709 = vunpack.c.h.b16 %v88
  %v710 = vunpack.c.l.b16 %v89
  %v711 = vunpack.c.h.b16 %v89
  %v712 = vunpack.c.l.b16 %v90
  %v713 = vunpack.c.h.b16 %v90
  %v714 = vunpack.c.l.b16 %v91
  %v715 = vunpack.c.h.b16 %v91
  %v716 = vunpack.c.l.b16 %v92
  %v717 = vunpack.c.h.b16 %v92
  %v718 = vunpack.c.l.b16 %v93
  %v719 = vunpack.c.h.b16 %v93
  %v720 = vunpack.c.l.b16 %v94
  %v721 = vunpack.c.h.b16 %v94
  %v722 = vunpack.c.l.b16 %v95
  %v723 = vunpack.c.h.b16 %v95
  %v724 = vunpack.c.l.b16 %v96
  %v725 = vunpack.c.h.b16 %v96
  %v726 = vunpack.c.l.b16 %v97
  %v727 = vunpack.c.h.b16 %v97
  %v728 = vunpack.c.l.b16 %v98
  %v729 = vunpack.c.h.b16 %v98
  %v730 = vunpack.c.l.b16 %v99
  %v731 = vunpack.c.h.b16 %v99
  %v732 = vunpack.c.l.b16 %v100
  %v733 = vunpack.c.h.b16 %v100
  %v734 = vunpack.c.l.b16 %v101
  %v735 = vunpack.c.h.b16 %v101
  %v736 = vunpack.c.l.b16 %v102
  %v737 = vunpack.c.h.b16 %v102
  %v738 = vunpack.c.l.b16 %v103
  %v739 = vunpack.c.h.b16 %v103
  %v740 = vunpack.c.l.b16 %v104
  %v741 = vunpack.c.h.b16 %v104
  %v742 = vunpack.c.l.b16 %v105
  %v743 = vunpack.c.h.b16 %v105
  %v744 = vunpack.c.l.b16 %v106
  %v745 = vunpack.c.h.b16 %v106
  %v746 = vunpack.c.l.b16 %v107
  %v747 = vunpack.c.h.b16 %v107
  %v748 = vunpack.c.l.b16 %v108
  %v749 = vunpack.c.h.b16 %v108
  %v750 = vunpack.c.l.b16 %v109
  %v751 = vunpack.c.h.b16 %v109
  %v752 = vunpack.c.l.b16 %v110
  %v753 = vunpack.c.h.b16 %v110
  %v754 = vunpack.c.l.b16 %v111
  %v755 = vunpack.c.h.b16 %v111
  %v756 = vunpack.c.l.b16 %v112
  %v757 = vunpack.c.h.b16 %v112
  %v758 = vunpack.c.l.b16 %v113
  %v759 = vunpack.c.h.b16 %v113
  %v760 = vunpack.c.l.b16 %v114
  %v761 = vunpack.c.h.b16 %v114
  %v762 = vunpack.c.l.b16 %v115
  %v763 = vunpack.c.h.b16 %v115
  %v764 = vunpack.c.l.b16 %v116
  %v765 = vunpack.c.h.b16 %v116
  %v766 = vunpack.c.l.b16 %v117
  %v767 = vunpack.c.h.b16 %v117
  %v768 = vunpack.c.l.b16 %v118
  %v769 = vunpack.c.h.b16 %v118
  %v770 = vunpack.c.l.b16 %v119
  %v771 = vunpack.c.h.b16 %v119
  %v772 = vunpack.c.l.b16 %v120
  %v773 = vunpack.c.h.b16 %v120
  %v774 = vunpack.c.l.b16 %v121
  %v775 = vunpack.c.h.b16 %v121
  %v776 = vunpack.c.l.b16 %v122
  %v777 = vunpack.c.h.b16 %v122
  %v778 = vunpack.c.l.b16 %v123
  %v779 = vunpack.c.h.b16 %v123
  %v780 = vunpack.c.l.b16 %v124
  %v781 = vunpack.c.h.b16 %v124
  %v782 = vunpack.c.l.b16 %v125
  %v783 = vunpack.c.h.b16 %v125
  %v784 = vunpack.c.l.b16 %v126
  %v785 = vunpack.c.h.b16 %v126
  %v786 = vunpack.c.l.b16 %v127
  %v787 = vunpack.c.h.b16 %v127
  %v788 = vunpack.c.l.b16 %v128
  %v789 = vunpack.c.h.b16 %v128
  %v790 = vunpack.c.l.b16 %v129
  %v791 = vunpack.c.h.b16 %v129
  %v792 = vunpack.c.l.b16 %v130
  %v793 = vunpack.c.h.b16 %v130
  %v794 = vunpack.c.l.b16 %v131
  %v795 = vunpack.c.h.b16 %v131
  %v796 = vunpack.c.l.b16 %v132
  %v797 = vunpack.c.h.b16 %v132
  %v798 = vunpack.c.l.b16 %v133
  %v799 = vunpack.c.h.b16 %v133
  %v800 = vunpack.c.l.b16 %v134
  %v801 = vunpack.c.h.b16 %v134
  %v802 = vunpack.c.l.b16 %v135
  %v803 = vunpack.c.h.b16 %v135
  %v804 = vunpack.c.l.b16 %v136
  %v805 = vunpack.c.h.b16 %v136
  %v806 = vunpack.c.l.b16 %v137
  %v807 = vunpack.c.h.b16 %v137
  %v808 = vunpack.c.l.b16 %v138
  %v809 = vunpack.c.h.b16 %v138
  %v810 = vunpack.c.l.b16 %v139
  %v811 = vunpack.c.h.b16 %v139
  %v812 = vunpack.c.l.b16 %v140
  %v813 = vunpack.c.h.b16 %v140
  %v814 = vunpack.c.l.b16 %v141
  %v815 = vunpack.c.h.b16 %v141
  %v816 = vunpack.c.l.b16 %v142
  %v817 = vunpack.c.h.b16 %v142
  %v818 = vunpack.c.l.b16 %v143
  %v819 = vunpack.c.h.b16 %v143
  %v820 = vunpack.c.l.b16 %v144
  %v821 = vunpack.c.h.b16 %v144
  %v822 = vunpack.c.l.b16 %v145
  %v823 = vunpack.c.h.b16 %v145
  %v824 = vunpack.c.l.b16 %v146
  %v825 = vunpack.c.h.b16 %v146
  %v826 = vunpack.c.l.b16 %v147
  %v827 = vunpack.c.h.b16 %v147
  %v828 = vunpack.c.l.b16 %v148
  %v829 = vunpack.c.h.b16 %v148
  %v830 = vunpack.c.l.b16 %v149
  %v831 = vunpack.c.h.b16 %v149
  %v832 = vunpack.c.l.b16 %v150
  %v833 = vunpack.c.h.b16 %v150
  %v834 = vunpack.c.l.b16 %v151
  %v835 = vunpack.c.h.b16 %v151
  %v836 = vunpack.c.l.b16 %v152
  %v837 = vunpack.c.h.b16 %v152
  %v838 = vunpack.c.l.b16 %v153
  %v839 = vunpack.c.h.b16 %v153
  %v840 = vunpack.c.l.b16 %v154
  %v841 = vunpack.c.h.b16 %v154
  %v842 = vunpack.c.l.b16 %v155
  %v843 = vunpack.c.h.b16 %v155
  %v844 = vunpack.c.l.b16 %v156
  %v845 = vunpack.c.h.b16 %v156
  %v846 = vunpack.c.l.b16 %v157
  %v847 = vunpack.c.h.b16 %v157
  %v848 = vunpack.c.l.b16 %v158
  %v849 = vunpack.c.h.b16 %v158
  %v850 = vunpack.c.l.b16 %v159
  %v851 = vunpack.c.h.b16 %v159
  %v852 = vunpack.c.l.b16 %v160
  %v853 = vunpack.c.h.b16 %v160
  %v854 = vunpack.c.l.b16 %v161
  %v855 = vunpack.c.h.b16 %v161
  %v856 = vunpack.c.l.b16 %v162
  %v857 = vunpack.c.h.b16 %v162
  %v858 = vunpack.c.l.b16 %v163
  %v859 = vunpack.c.h.b16 %v163
  %v860 = vunpack.c.l.b16 %v164
  %v861 = vunpack.c.h.b16 %v164
  %v862 = vunpack.c.l.b16 %v165
  %v863 = vunpack.c.h.b16 %v165
  %v864 = vunpack.c.l.b16 %v166
  %v865 = vunpack.c.h.b16 %v166
  %v866 = vunpack.c.l.b16 %v167
  %v867 = vunpack.c.h.b16 %v167
  %v868 = vunpack.c.l.b16 %v168
  %v869 = vunpack.c.h.b16 %v168
  %v870 = vunpack.c.l.b16 %v169
  %v871 = vunpack.c.h.b16 %v169
  %v872 = vunpack.c.l.b16 %v170
  %v873 = vunpack.c.h.b16 %v170
  %v874 = vunpack.c.l.b16 %v171
  %v875 = vunpack.c.h.b16 %v171
  %v876 = vunpack.c.l.b16 %v172
  %v877 = vunpack.c.h.b16 %v172
  %v878 = vunpack.c.l.b16 %v173
  %v879 = vunpack.c.h.b16 %v173
  %v880 = vunpack.c.l.b16 %v174
  %v881 = vunpack.c.h.b16 %v174
  %v882 = vunpack.c.l.b16 %v175
  %v883 = vunpack.c.h.b16 %v175
  %v884 = vunpack.c.l.b16 %v176
  %v885 = vunpack.c.h.b16 %v176
  %v886 = vunpack.c.l.b16 %v177
  %v887 = vunpack.c.h.b16 %v177
  %v888 = vunpack.c.l.b16 %v178
  %v889 = vunpack.c.h.b16 %v178
  %v890 = vunpack.c.l.b16 %v179
  %v891 = vunpack.c.h.b16 %v179
  %v892 = vunpack.c.l.b16 %v180
  %v893 = vunpack.c.h.b16 %v180
  %v894 = vunpack.c.l.b16 %v181
  %v895 = vunpack.c.h.b16 %v181
  %v896 = vunpack.c.l.b16 %v182
  %v897 = vunpack.c.h.b16 %v182
  %v898 = vunpack.c.l.b16 %v183
  %v899 = vunpack.c.h.b16 %v183
  %v900 = vunpack.c.l.b16 %v184
  %v901 = vunpack.c.h.b16 %v184
  %v902 = vunpack.c.l.b16 %v185
  %v903 = vunpack.c.h.b16 %v185
  %v904 = vunpack.c.l.b16 %v186
  %v905 = vunpack.c.h.b16 %v186
  %v906 = vunpack.c.l.b16 %v187
  %v907 = vunpack.c.h.b16 %v187
  %v908 = vunpack.c.l.b16 %v188
  %v909 = vunpack.c.h.b16 %v188
  %v910 = vunpack.c.l.b16 %v189
  %v911 = vunpack.c.h.b16 %v189
  %v912 = vunpack.c.l.b16 %v190
  %v913 = vunpack.c.h.b16 %v190
  %v914 = vunpack.c.l.b16 %v191
  %v915 = vunpack.c.h.b16 %v191
  %v916 = vunpack.c.l.b16 %v192
  %v917 = vunpack.c.h.b16 %v192
  %v918 = vunpack.c.l.b16 %v193
  %v919 = vunpack.c.h.b16 %v193
  %v920 = vunpack.c.l.b16 %v194
  %v921 = vunpack.c.h.b16 %v194
  %v922 = vunpack.c.l.b16 %v195
  %v923 = vunpack.c.h.b16 %v195
  %v924 = vunpack.c.l.b16 %v196
  %v925 = vunpack.c.h.b16 %v196
  %v926 = vunpack.c.l.b16 %v197
  %v927 = vunpack.c.h.b16 %v197
  %v928 = vunpack.c.l.b16 %v198
  %v929 = vunpack.c.h.b16 %v198
  %v930 = vunpack.c.l.b16 %v199
  %v931 = vunpack.c.h.b16 %v199
  %v932 = vunpack.c.l.b16 %v200
  %v933 = vunpack.c.h.b16 %v200
  %v934 = vunpack.c.l.b16 %v201
  %v935 = vunpack.c.h.b16 %v201
  %v936 = vunpack.c.l.b16 %v202
  %v937 = vunpack.c.h.b16 %v202
  %v938 = vunpack.c.l.b16 %v203
  %v939 = vunpack.c.h.b16 %v203
  %v940 = vunpack.c.l.b16 %v204
  %v941 = vunpack.c.h.b16 %v204
  %v942 = vunpack.c.l.b16 %v205
  %v943 = vunpack.c.h.b16 %v205
  %v944 = vunpack.c.l.b16 %v206
  %v945 = vunpack.c.h.b16 %v206
  %v946 = vunpack.c.l.b16 %v207
  %v947 = vunpack.c.h.b16 %v207
  %v948 = vunpack.c.l.b16 %v208
  %v949 = vunpack.c.h.b16 %v208
  %v950 = vunpack.c.l.b16 %v209
  %v951 = vunpack.c.h.b16 %v209
  %v952 = vunpack.c.l.b16 %v210
  %v953 = vunpack.c.h.b16 %v210
  %v954 = vunpack.c.l.b16 %v211
  %v955 = vunpack.c.h.b16 %v211
  %v956 = vunpack.c.l.b16 %v212
  %v957 = vunpack.c.h.b16 %v212
  %v958 = vunpack.c.l.b16 %v213
  %v959 = vunpack.c.h.b16 %v213
  %v960 = vunpack.c.l.b16 %v214
  %v961 = vunpack.c.h.b16 %v214
  %v962 = vunpack.c.l.b16 %v215
  %v963 = vunpack.c.h.b16 %v215
  %v964 = vunpack.c.l.b16 %v216
  %v965 = vunpack.c.h.b16 %v216
  %v966 = vunpack.c.l.b16 %v217
  %v967 = vunpack.c.h.b16 %v217
  %v968 = vunpack.c.l.b16 %v218
  %v969 = vunpack.c.h.b16 %v218
  %v970 = vunpack.c.l.b16 %v219
  %v971 = vunpack.c.h.b16 %v219
  %v972 = vunpack.c.l.b16 %v220
  %v973 = vunpack.c.h.b16 %v220
  %v974 = vunpack.c.l.b16 %v221
  %v975 = vunpack.c.h.b16 %v221
  %v976 = vunpack.c.l.b16 %v222
  %v977 = vunpack.c.h.b16 %v222
  %v978 = vunpack.c.l.b16 %v223
  %v979 = vunpack.c.h.b16 %v223
  %v980 = vunpack.c.l.b16 %v224
  %v981 = vunpack.c.h.b16 %v224
  %v982 = vunpack.c.l.b16 %v225
  %v983 = vunpack.c.h.b16 %v225
  %v984 = vunpack.c.l.b16 %v226
  %v985 = vunpack.c.h.b16 %v226
  %v986 = vunpack.c.l.b16 %v227
  %v987 = vunpack.c.h.b16 %v227
  %v988 = vunpack.c.l.b16 %v228
  %v989 = vunpack.c.h.b16 %v228
  %v990 = vunpack.c.l.b16 %v229
  %v991 = vunpack.c.h.b16 %v229
  %v992 = vunpack.c.l.b16 %v230
  %v993 = vunpack.c.h.b16 %v230
  %v994 = vunpack.c.l.b16 %v231
  %v995 = vunpack.c.h.b16 %v231
  %v996 = vunpack.c.l.b16 %v232
  %v997 = vunpack.c.h.b16 %v232
  %v998 = vunpack.c.l.b16 %v233
  %v999 = vunpack.c.h.b16 %v233
  %v1000 = vunpack.c.l.b16 %v234
  %v1001 = vunpack.c.h.b16 %v234
  %v1002 = vunpack.c.l.b16 %v235
  %v1003 = vunpack.c.h.b16 %v235
  %v1004 = vunpack.c.l.b16 %v236
  %v1005 = vunpack.c.h.b16 %v236
  %v1006 = vunpack.c.l.b16 %v237
  %v1007 = vunpack.c.h.b16 %v237
  %v1008 = vunpack.c.l.b16 %v238
  %v1009 = vunpack.c.h.b16 %v238
  %v1010 = vunpack.c.l.b16 %v239
  %v1011 = vunpack.c.h.b16 %v239
  %v1012 = vunpack.c.l.b16 %v240
  %v1013 = vunpack.c.h.b16 %v240
  %v1014 = vunpack.c.l.b16 %v241
  %v1015 = vunpack.c.h.b16 %v241
  %v1016 = vunpack.c.l.b16 %v242
  %v1017 = vunpack.c.h.b16 %v242
  %v1018 = vunpack.c.l.b16 %v243
  %v1019 = vunpack.c.h.b16 %v243
  %v1020 = vunpack.c.l.b16 %v244
  %v1021 = vunpack.c.h.b16 %v244
  %v1022 = vunpack.c.l.b16 %v245
  %v1023 = vunpack.c.h.b16 %v245
  %v1024 = vunpack.c.l.b16 %v246
  %v1025 = vunpack.c.h.b16 %v246
  %v1026 = vunpack.c.l.b16 %v247
  %v1027 = vunpack.c.h.b16 %v247
  %v1028 = vunpack.c.l.b16 %v248
  %v1029 = vunpack.c.h.b16 %v248
  %v1030 = vunpack.c.l.b16 %v249
  %v1031 = vunpack.c.h.b16 %v249
  %v1032 = vunpack.c.l.b16 %v250
  %v1033 = vunpack.c.h.b16 %v250
  %v1034 = vunpack.c.l.b16 %v251
  %v1035 = vunpack.c.h.b16 %v251
  %v1036 = vunpack.c.l.b16 %v252
  %v1037 = vunpack.c.h.b16 %v252
  %v1038 = vunpack.c.l.b16 %v253
  %v1039 = vunpack.c.h.b16 %v253
  %v1040 = vunpack.c.l.b16 %v254
  %v1041 = vunpack.c.h.b16 %v254
  %v1042 = vunpack.c.l.b16 %v255
  %v1043 = vunpack.c.h.b16 %v255
  %v1044 = vunpack.c.l.b16 %v256
  %v1045 = vunpack.c.h.b16 %v256
  %v1046 = vunpack.c.l.b16 %v257
  %v1047 = vunpack.c.h.b16 %v257
  %v1048 = vunpack.c.l.b16 %v258
  %v1049 = vunpack.c.h.b16 %v258
  %v1050 = vunpack.c.l.b16 %v259
  %v1051 = vunpack.c.h.b16 %v259
  %v1052 = vunpack.c.l.b16 %v260
  %v1053 = vunpack.c.h.b16 %v260
  %v1054 = vunpack.c.l.b16 %v261
  %v1055 = vunpack.c.h.b16 %v261
  %v1056 = vunpack.c.l.b16 %v262
  %v1057 = vunpack.c.h.b16 %v262
  %v1058 = vunpack.c.l.b16 %v263
  %v1059 = vunpack.c.h.b16 %v263
  %v1060 = vpack.c.b16 %v634, %v628
  %v1061 = vpack.c.b16 %v635, %v629
  %v1062 = vpack.c.b16 %v636, %v630
  %v1063 = vpack.c.b16 %v637, %v631
  %v1064 = vpack.c.b16 %v638, %v632
  %v1065 = vpack.c.b16 %v639, %v633
  %v1066 = vpack.c.b16 %v646, %v640
  %v1067 = vpack.c.b16 %v647, %v641
  %v1068 = vpack.c.b16 %v648, %v642
  %v1069 = vpack.c.b16 %v649, %v643
  %v1070 = vpack.c.b16 %v650, %v644
  %v1071 = vpack.c.b16 %v651, %v645
  %v1072 = vpack.c.b16 %v658, %v652
  %v1073 = vpack.c.b16 %v659, %v653
  %v1074 = vpack.c.b16 %v660, %v654
  %v1075 = vpack.c.b16 %v661, %v655
  %v1076 = vpack.c.b16 %v662, %v656
  %v1077 = vpack.c.b16 %v663, %v657
  %v1078 = vpack.c.b16 %v670, %v664
  %v1079 = vpack.c.b16 %v671, %v665
  %v1080 = vpack.c.b16 %v672, %v666
  %v1081 = vpack.c.b16 %v673, %v667
  %v1082 = vpack.c.b16 %v674, %v668
  %v1083 = vpack.c.b16 %v675, %v669
  %v1084 = vpack.c.b16 %v682, %v676
  %v1085 = vpack.c.b16 %v683, %v677
  %v1086 = vpack.c.b16 %v684, %v678
  %v1087 = vpack.c.b16 %v685, %v679
  %v1088 = vpack.c.b16 %v686, %v680
  %v1089 = vpack.c.b16 %v687, %v681
  %v1090 = vpack.c.b16 %v694, %v688
  %v1091 = vpack.c.b16 %v695, %v689
  %v1092 = vpack.c.b16 %v696, %v690
  %v1093 = vpack.c.b16 %v697, %v691
  %v1094 = vpack.c.b16 %v698, %v692
  %v1095 = vpack.c.b16 %v699, %v693
  %v1096 = vpack.c.b16 %v706, %v700
  %v1097 = vpack.c.b16 %v707, %v701
  %v1098 = vpack.c.b16 %v708, %v702
  %v1099 = vpack.c.b16 %v709, %v703
  %v1100 = vpack.c.b16 %v710, %v704
  %v1101 = vpack.c.b16 %v711, %v705
  %v1102 = vpack.c.b16 %v718, %v712
  %v1103 = vpack.c.b16 %v719, %v713
  %v1104 = vpack.c.b16 %v720, %v714
  %v1105 = vpack.c.b16 %v721, %v715
  %v1106 = vpack.c.b16 %v722, %v716
  %v1107 = vpack.c.b16 %v723, %v717
  %v1108 = vpack.c.b16 %v730, %v724
  %v1109 = vpack.c.b16 %v731, %v725
  %v1110 = vpack.c.b16 %v732, %v726
  %v1111 = vpack.c.b16 %v733, %v727
  %v1112 = vpack.c.b16 %v734, %v728
  %v1113 = vpack.c.b16 %v735, %v729
  %v1114 = vpack.c.b16 %v742, %v736
  %v1115 = vpack.c.b16 %v743, %v737
  %v1116 = vpack.c.b16 %v744, %v738
  %v1117 = vpack.c.b16 %v745, %v739
  %v1118 = vpack.c.b16 %v746, %v740
  %v1119 = vpack.c.b16 %v747, %v741
  %v1120 = vpack.c.b16 %v754, %v748
  %v1121 = vpack.c.b16 %v755, %v749
  %v1122 = vpack.c.b16 %v756, %v750
  %v1123 = vpack.c.b16 %v757, %v751
  %v1124 = vpack.c.b16 %v758, %v752
  %v1125 = vpack.c.b16 %v759, %v753
  %v1126 = vpack.c.b16 %v766, %v760
  %v1127 = vpack.c.b16 %v767, %v761
  %v1128 = vpack.c.b16 %v768, %v762
  %v1129 = vpack.c.b16 %v769, %v763
  %v1130 = vpack.c.b16 %v770, %v764
  %v1131 = vpack.c.b16 %v771, %v765
  %v1132 = vpack.c.b16 %v778, %v772
  %v1133 = vpack.c.b16 %v779, %v773
  %v1134 = vpack.c.b16 %v780, %v774
  %v1135 = vpack.c.b16 %v781, %v775
  %v1136 = vpack.c.b16 %v782, %v776
  %v1137 = vpack.c.b16 %v783, %v777
  %v1138 = vpack.c.b16 %v790, %v784
  %v1139 = vpack.c.b16 %v791, %v785
  %v1140 = vpack.c.b16 %v792, %v786
  %v1141 = vpack.c.b16 %v793, %v787
  %v1142 = vpack.c.b16 %v794, %v788
  %v1143 = vpack.c.b16 %v795, %v789
  %v1144 = vpack.c.b16 %v802, %v796
  %v1145 = vpack.c.b16 %v803, %v797
  %v1146 = vpack.c.b16 %v804, %v798
  %v1147 = vpack.c.b16 %v805, %v799
  %v1148 = vpack.c.b16 %v806, %v800
  %v1149 = vpack.c.b16 %v807, %v801
  %v1150 = vpack.c.b16 %v814, %v808
  %v1151 = vpack.c.b16 %v815, %v809
  %v1152 = vpack.c.b16 %v816, %v810
  %v1153 = vpack.c.b16 %v817, %v811
  %v1154 = vpack.c.b16 %v818, %v812
  %v1155 = vpack.c.b16 %v819, %v813
  %v1156 = vpack.c.b16 %v826, %v820
  %v1157 = vpack.c.b16 %v827, %v821
  %v1158 = vpack.c.b16 %v828, %v822
  %v1159 = vpack.c.b16 %v829, %v823
  %v1160 = vpack.c.b16 %v830, %v824
  %v1161 = vpack.c.b16 %v831, %v825
  %v1162 = vpack.c.b16 %v838, %v832
  %v1163 = vpack.c.b16 %v839, %v833
  %v1164 = vpack.c.b16 %v840, %v834
  %v1165 = vpack.c.b16 %v841, %v835
  %v1166 = vpack.c.b16 %v842, %v836
  %v1167 = vpack.c.b16 %v843, %v837
  %v1168 = vpack.c.b16 %v850, %v844
  %v1169 = vpack.c.b16 %v851, %v845
  %v1170 = vpack.c.b16 %v852, %v846
  %v1171 = vpack.c.b16 %v853, %v847
  %v1172 = vpack.c.b16 %v854, %v848
  %v1173 = vpack.c.b16 %v855, %v849
  %v1174 = vpack.c.b16 %v862, %v856
  %v1175 = vpack.c.b16 %v863, %v857
  %v1176 = vpack.c.b16 %v864, %v858
  %v1177 = vpack.c.b16 %v865, %v859
  %v1178 = vpack.c.b16 %v866, %v860
  %v1179 = vpack.c.b16 %v867, %v861
  %v1180 = vpack.c.b16 %v874, %v868
  %v1181 = vpack.c.b16 %v875, %v869
  %v1182 = vpack.c.b16 %v876, %v870
  %v1183 = vpack.c.b16 %v877, %v871
  %v1184 = vpack.c.b16 %v878, %v872
  %v1185 = vpack.c.b16 %v879, %v873
  %v1186 = vpack.c.b16 %v886, %v880
  %v1187 = vpack.c.b16 %v887, %v881
  %v1188 = vpack.c.b16 %v888, %v882
  %v1189 = vpack.c.b16 %v889, %v883
  %v1190 = vpack.c.b16 %v890, %v884
  %v1191 = vpack.c.b16 %v891, %v885
  %v1192 = vpack.c.b16 %v898, %v892
  %v1193 = vpack.c.b16 %v899, %v893
  %v1194 = vpack.c.b16 %v900, %v894
  %v1195 = vpack.c.b16 %v901, %v895
  %v1196 = vpack.c.b16 %v902, %v896
  %v1197 = vpack.c.b16 %v903, %v897
  %v1198 = vpack.c.b16 %v910, %v904
  %v1199 = vpack.c.b16 %v911, %v905
  %v1200 = vpack.c.b16 %v912, %v906
  %v1201 = vpack.c.b16 %v913, %v907
  %v1202 = vpack.c.b16 %v914, %v908
  %v1203 = vpack.c.b16 %v915, %v909
  %v1204 = vpack.c.b16 %v922, %v916
  %v1205 = vpack.c.b16 %v923, %v917
  %v1206 = vpack.c.b16 %v924, %v918
  %v1207 = vpack.c.b16 %v925, %v919
  %v1208 = vpack.c.b16 %v926, %v920
  %v1209 = vpack.c.b16 %v927, %v921
  %v1210 = vpack.c.b16 %v934, %v928
  %v1211 = vpack.c.b16 %v935, %v929
  %v1212 = vpack.c.b16 %v936, %v930
  %v1213 = vpack.c.b16 %v937, %v931
  %v1214 = vpack.c.b16 %v938, %v932
  %v1215 = vpack.c.b16 %v939, %v933
  %v1216 = vpack.c.b16 %v946, %v940
  %v1217 = vpack.c.b16 %v947, %v941
  %v1218 = vpack.c.b16 %v948, %v942
  %v1219 = vpack.c.b16 %v949, %v943
  %v1220 = vpack.c.b16 %v950, %v944
  %v1221 = vpack.c.b16 %v951, %v945
  %v1222 = vpack.c.b16 %v958, %v952
  %v1223 = vpack.c.b16 %v959, %v953
  %v1224 = vpack.c.b16 %v960, %v954
  %v1225 = vpack.c.b16 %v961, %v955
  %v1226 = vpack.c.b16 %v962, %v956
  %v1227 = vpack.c.b16 %v963, %v957
  %v1228 = vpack.c.b16 %v970, %v964
  %v1229 = vpack.c.b16 %v971, %v965
  %v1230 = vpack.c.b16 %v972, %v966
  %v1231 = vpack.c.b16 %v973, %v967
  %v1232 = vpack.c.b16 %v974, %v968
  %v1233 = vpack.c.b16 %v975, %v969
  %v1234 = vpack.c.b16 %v982, %v976
  %v1235 = vpack.c.b16 %v983, %v977
  %v1236 = vpack.c.b16 %v984, %v978
  %v1237 = vpack.c.b16 %v985, %v979
  %v1238 = vpack.c.b16 %v986, %v980
  %v1239 = vpack.c.b16 %v987, %v981
  %v1240 = vpack.c.b16 %v994, %v988
  %v1241 = vpack.c.b16 %v995, %v989
  %v1242 = vpack.c.b16 %v996, %v990
  %v1243 = vpack.c.b16 %v997, %v991
  %v1244 = vpack.c.b16 %v998, %v992
  %v1245 = vpack.c.b16 %v999, %v993
  %v1246 = vpack.c.b16 %v1006, %v1000
  %v1247 = vpack.c.b16 %v1007, %v1001
  %v1248 = vpack.c.b16 %v1008, %v1002
  %v1249 = vpack.c.b16 %v1009, %v1003
  %v1250 = vpack.c.b16 %v1010, %v1004
  %v1251 = vpack.c.b16 %v1011, %v1005
  %v1252 = vpack.c.b16 %v1018, %v1012
  %v1253 = vpack.c.b16 %v1019, %v1013
  %v1254 = vpack.c.b16 %v1020, %v1014
  %v1255 = vpack.c.b16 %v1021, %v1015
  %v1256 = vpack.c.b16 %v1022, %v1016
  %v1257 = vpack.c.b16 %v1023, %v1017
  %v1258 = vpack.c.b16 %v1030, %v1024
  %v1259 = vpack.c.b16 %v1031, %v1025
  %v1260 = vpack.c.b16 %v1032, %v1026
  %v1261 = vpack.c.b16 %v1033, %v1027
  %v1262 = vpack.c.b16 %v1034, %v1028
  %v1263 = vpack.c.b16 %v1035, %v1029
  %v1264 = vpack.c.b16 %v1042, %v1036
  %v1265 = vpack.c.b16 %v1043, %v1037
  %v1266 = vpack.c.b16 %v1044, %v1038
  %v1267 = vpack.c.b16 %v1045, %v1039
  %v1268 = vpack.c.b16 %v1046, %v1040
  %v1269 = vpack.c.b16 %v1047, %v1041
  %v1270 = vpack.c.b16 %v1054, %v1048
  %v1271 = vpack.c.b16 %v1055, %v1049
  %v1272 = vpack.c.b16 %v1056, %v1050
  %v1273 = vpack.c.b16 %v1057, %v1051
  %v1274 = vpack.c.b16 %v1058, %v1052
  %v1275 = vpack.c.b16 %v1059, %v1053
  %vm1492 = vcmask 523264
  %v1494 = vsel %vm1492, %v380, 0
  %v1497 = vsel %vm1492, %v385, 0
  %v1500 = vsel %vm1492, %v390, 0
  %v1503 = vsel %vm1492, %v395, 0
  %1505 = vmatpush.bf16.msra.mxu0 %v1102
  %1506 = vmatpush.bf16.msra.mxu0 %v1096
  %1507 = vmatpush.bf16.msra.mxu0 %v1090
  %1508 = vmatpush.bf16.msra.mxu0 %v1084
  %1509 = vmatpush.bf16.msra.mxu0 %v1078
  %1510 = vmatpush.bf16.msra.mxu0 %v1072
  %1511 = vmatpush.bf16.msra.mxu0 %v1066
  %1512 = vmatpush.bf16.msra.mxu0 %v1060
  %1513 = vmatmul.bf16.gmra.mxu0 %v376
  %v1514 = vpop.f32.mrf.mxu0
  %v1515 = vadd.f32 %v275, %v1514
  %v1516 = vpop.f32.mrf.mxu0
  %v1517 = vadd.f32 %v280, %v1516
  %1518 = vmatmul.bf16.gmra.mxu0 %v381
  %v1519 = vpop.f32.mrf.mxu0
  %v1520 = vadd.f32 %v285, %v1519
  %v1521 = vpop.f32.mrf.mxu0
  %v1522 = vadd.f32 %v290, %v1521
  %1523 = vmatmul.bf16.gmra.mxu0 %v386
  %v1524 = vpop.f32.mrf.mxu0
  %v1525 = vadd.f32 %v295, %v1524
  %v1526 = vpop.f32.mrf.mxu0
  %v1527 = vadd.f32 %v300, %v1526
  %1528 = vmatmul.bf16.gmra.mxu0 %v391
  %v1529 = vpop.f32.mrf.mxu0
  %v1530 = vadd.f32 %v305, %v1529
  %v1531 = vpop.f32.mrf.mxu0
  %v1532 = vadd.f32 %v310, %v1531
  %1533 = vdwg.mxu0
  %1534 = vmatpush.bf16.msra.mxu0 %v1150
  %1535 = vmatpush.bf16.msra.mxu0 %v1144
  %1536 = vmatpush.bf16.msra.mxu0 %v1138
  %1537 = vmatpush.bf16.msra.mxu0 %v1132
  %1538 = vmatpush.bf16.msra.mxu0 %v1126
  %1539 = vmatpush.bf16.msra.mxu0 %v1120
  %1540 = vmatpush.bf16.msra.mxu0 %v1114
  %1541 = vmatpush.bf16.msra.mxu0 %v1108
  %1542 = vmatmul.bf16.gmra.mxu0 %v377
  %v1543 = vpop.f32.mrf.mxu0
  %v1544 = vadd.f32 %v1515, %v1543
  %v1545 = vpop.f32.mrf.mxu0
  %v1546 = vadd.f32 %v1517, %v1545
  %1547 = vmatmul.bf16.gmra.mxu0 %v382
  %v1548 = vpop.f32.mrf.mxu0
  %v1549 = vadd.f32 %v1520, %v1548
  %v1550 = vpop.f32.mrf.mxu0
  %v1551 = vadd.f32 %v1522, %v1550
  %1552 = vmatmul.bf16.gmra.mxu0 %v387
  %v1553 = vpop.f32.mrf.mxu0
  %v1554 = vadd.f32 %v1525, %v1553
  %v1555 = vpop.f32.mrf.mxu0
  %v1556 = vadd.f32 %v1527, %v1555
  %1557 = vmatmul.bf16.gmra.mxu0 %v392
  %v1558 = vpop.f32.mrf.mxu0
  %v1559 = vadd.f32 %v1530, %v1558
  %v1560 = vpop.f32.mrf.mxu0
  %v1561 = vadd.f32 %v1532, %v1560
  %1562 = vdwg.mxu0
  %1563 = vmatpush.bf16.msra.mxu0 %v1198
  %1564 = vmatpush.bf16.msra.mxu0 %v1192
  %1565 = vmatpush.bf16.msra.mxu0 %v1186
  %1566 = vmatpush.bf16.msra.mxu0 %v1180
  %1567 = vmatpush.bf16.msra.mxu0 %v1174
  %1568 = vmatpush.bf16.msra.mxu0 %v1168
  %1569 = vmatpush.bf16.msra.mxu0 %v1162
  %1570 = vmatpush.bf16.msra.mxu0 %v1156
  %1571 = vmatmul.bf16.gmra.mxu0 %v378
  %v1572 = vpop.f32.mrf.mxu0
  %v1573 = vadd.f32 %v1544, %v1572
  %v1574 = vpop.f32.mrf.mxu0
  %v1575 = vadd.f32 %v1546, %v1574
  %1576 = vmatmul.bf16.gmra.mxu0 %v383
  %v1577 = vpop.f32.mrf.mxu0
  %v1578 = vadd.f32 %v1549, %v1577
  %v1579 = vpop.f32.mrf.mxu0
  %v1580 = vadd.f32 %v1551, %v1579
  %1581 = vmatmul.bf16.gmra.mxu0 %v388
  %v1582 = vpop.f32.mrf.mxu0
  %v1583 = vadd.f32 %v1554, %v1582
  %v1584 = vpop.f32.mrf.mxu0
  %v1585 = vadd.f32 %v1556, %v1584
  %1586 = vmatmul.bf16.gmra.mxu0 %v393
  %v1587 = vpop.f32.mrf.mxu0
  %v1588 = vadd.f32 %v1559, %v1587
  %v1589 = vpop.f32.mrf.mxu0
  %v1590 = vadd.f32 %v1561, %v1589
  %1591 = vdwg.mxu0
  %1592 = vmatpush.bf16.msra.mxu0 %v1246
  %1593 = vmatpush.bf16.msra.mxu0 %v1240
  %1594 = vmatpush.bf16.msra.mxu0 %v1234
  %1595 = vmatpush.bf16.msra.mxu0 %v1228
  %1596 = vmatpush.bf16.msra.mxu0 %v1222
  %1597 = vmatpush.bf16.msra.mxu0 %v1216
  %1598 = vmatpush.bf16.msra.mxu0 %v1210
  %1599 = vmatpush.bf16.msra.mxu0 %v1204
  %1600 = vmatmul.bf16.gmra.mxu0 %v379
  %v1601 = vpop.f32.mrf.mxu0
  %v1602 = vadd.f32 %v1573, %v1601
  %v1603 = vpop.f32.mrf.mxu0
  %v1604 = vadd.f32 %v1575, %v1603
  %1605 = vmatmul.bf16.gmra.mxu0 %v384
  %v1606 = vpop.f32.mrf.mxu0
  %v1607 = vadd.f32 %v1578, %v1606
  %v1608 = vpop.f32.mrf.mxu0
  %v1609 = vadd.f32 %v1580, %v1608
  %1610 = vmatmul.bf16.gmra.mxu0 %v389
  %v1611 = vpop.f32.mrf.mxu0
  %v1612 = vadd.f32 %v1583, %v1611
  %v1613 = vpop.f32.mrf.mxu0
  %v1614 = vadd.f32 %v1585, %v1613
  %1615 = vmatmul.bf16.gmra.mxu0 %v394
  %v1616 = vpop.f32.mrf.mxu0
  %v1617 = vadd.f32 %v1588, %v1616
  %v1618 = vpop.f32.mrf.mxu0
  %v1619 = vadd.f32 %v1590, %v1618
  %1620 = vdwg.mxu0
  %1621 = vmatpush.bf16.msra.mxu0 0
  %1622 = vmatpush.bf16.msra.mxu0 0
  %1623 = vmatpush.bf16.msra.mxu0 0
  %1624 = vmatpush.bf16.msra.mxu0 0
  %1625 = vmatpush.bf16.msra.mxu0 %v1270
  %1626 = vmatpush.bf16.msra.mxu0 %v1264
  %1627 = vmatpush.bf16.msra.mxu0 %v1258
  %1628 = vmatpush.bf16.msra.mxu0 %v1252
  %1629 = vmatmul.bf16.gmra.mxu0 %v1494
  %v1630 = vpop.f32.mrf.mxu0
  %v1631 = vadd.f32 %v1602, %v1630
  %v1632 = vpop.f32.mrf.mxu0
  %v1633 = vadd.f32 %v1604, %v1632
  %1634 = vmatmul.bf16.gmra.mxu0 %v1497
  %v1635 = vpop.f32.mrf.mxu0
  %v1636 = vadd.f32 %v1607, %v1635
  %v1637 = vpop.f32.mrf.mxu0
  %v1638 = vadd.f32 %v1609, %v1637
  %1639 = vmatmul.bf16.gmra.mxu0 %v1500
  %v1640 = vpop.f32.mrf.mxu0
  %v1641 = vadd.f32 %v1612, %v1640
  %v1642 = vpop.f32.mrf.mxu0
  %v1643 = vadd.f32 %v1614, %v1642
  %1644 = vmatmul.bf16.gmra.mxu0 %v1503
  %v1645 = vpop.f32.mrf.mxu0
  %v1646 = vadd.f32 %v1617, %v1645
  %v1647 = vpop.f32.mrf.mxu0
  %v1648 = vadd.f32 %v1619, %v1647
  %1649 = vdwg.mxu0
  %1650 = vmatpush.bf16.msra.mxu0 %v1103
  %1651 = vmatpush.bf16.msra.mxu0 %v1097
  %1652 = vmatpush.bf16.msra.mxu0 %v1091
  %1653 = vmatpush.bf16.msra.mxu0 %v1085
  %1654 = vmatpush.bf16.msra.mxu0 %v1079
  %1655 = vmatpush.bf16.msra.mxu0 %v1073
  %1656 = vmatpush.bf16.msra.mxu0 %v1067
  %1657 = vmatpush.bf16.msra.mxu0 %v1061
  %1658 = vmatmul.bf16.gmra.mxu0 %v376
  %v1659 = vpop.f32.mrf.mxu0
  %v1660 = vadd.f32 %v275, %v1659
  %v1661 = vpop.f32.mrf.mxu0
  %v1662 = vadd.f32 %v280, %v1661
  %1663 = vmatmul.bf16.gmra.mxu0 %v381
  %v1664 = vpop.f32.mrf.mxu0
  %v1665 = vadd.f32 %v285, %v1664
  %v1666 = vpop.f32.mrf.mxu0
  %v1667 = vadd.f32 %v290, %v1666
  %1668 = vmatmul.bf16.gmra.mxu0 %v386
  %v1669 = vpop.f32.mrf.mxu0
  %v1670 = vadd.f32 %v295, %v1669
  %v1671 = vpop.f32.mrf.mxu0
  %v1672 = vadd.f32 %v300, %v1671
  %1673 = vmatmul.bf16.gmra.mxu0 %v391
  %v1674 = vpop.f32.mrf.mxu0
  %v1675 = vadd.f32 %v305, %v1674
  %v1676 = vpop.f32.mrf.mxu0
  %v1677 = vadd.f32 %v310, %v1676
  %1678 = vdwg.mxu0
  %1679 = vmatpush.bf16.msra.mxu0 %v1151
  %1680 = vmatpush.bf16.msra.mxu0 %v1145
  %1681 = vmatpush.bf16.msra.mxu0 %v1139
  %1682 = vmatpush.bf16.msra.mxu0 %v1133
  %1683 = vmatpush.bf16.msra.mxu0 %v1127
  %1684 = vmatpush.bf16.msra.mxu0 %v1121
  %1685 = vmatpush.bf16.msra.mxu0 %v1115
  %1686 = vmatpush.bf16.msra.mxu0 %v1109
  %1687 = vmatmul.bf16.gmra.mxu0 %v377
  %v1688 = vpop.f32.mrf.mxu0
  %v1689 = vadd.f32 %v1660, %v1688
  %v1690 = vpop.f32.mrf.mxu0
  %v1691 = vadd.f32 %v1662, %v1690
  %1692 = vmatmul.bf16.gmra.mxu0 %v382
  %v1693 = vpop.f32.mrf.mxu0
  %v1694 = vadd.f32 %v1665, %v1693
  %v1695 = vpop.f32.mrf.mxu0
  %v1696 = vadd.f32 %v1667, %v1695
  %1697 = vmatmul.bf16.gmra.mxu0 %v387
  %v1698 = vpop.f32.mrf.mxu0
  %v1699 = vadd.f32 %v1670, %v1698
  %v1700 = vpop.f32.mrf.mxu0
  %v1701 = vadd.f32 %v1672, %v1700
  %1702 = vmatmul.bf16.gmra.mxu0 %v392
  %v1703 = vpop.f32.mrf.mxu0
  %v1704 = vadd.f32 %v1675, %v1703
  %v1705 = vpop.f32.mrf.mxu0
  %v1706 = vadd.f32 %v1677, %v1705
  %1707 = vdwg.mxu0
  %1708 = vmatpush.bf16.msra.mxu0 %v1199
  %1709 = vmatpush.bf16.msra.mxu0 %v1193
  %1710 = vmatpush.bf16.msra.mxu0 %v1187
  %1711 = vmatpush.bf16.msra.mxu0 %v1181
  %1712 = vmatpush.bf16.msra.mxu0 %v1175
  %1713 = vmatpush.bf16.msra.mxu0 %v1169
  %1714 = vmatpush.bf16.msra.mxu0 %v1163
  %1715 = vmatpush.bf16.msra.mxu0 %v1157
  %1716 = vmatmul.bf16.gmra.mxu0 %v378
  %v1717 = vpop.f32.mrf.mxu0
  %v1718 = vadd.f32 %v1689, %v1717
  %v1719 = vpop.f32.mrf.mxu0
  %v1720 = vadd.f32 %v1691, %v1719
  %1721 = vmatmul.bf16.gmra.mxu0 %v383
  %v1722 = vpop.f32.mrf.mxu0
  %v1723 = vadd.f32 %v1694, %v1722
  %v1724 = vpop.f32.mrf.mxu0
  %v1725 = vadd.f32 %v1696, %v1724
  %1726 = vmatmul.bf16.gmra.mxu0 %v388
  %v1727 = vpop.f32.mrf.mxu0
  %v1728 = vadd.f32 %v1699, %v1727
  %v1729 = vpop.f32.mrf.mxu0
  %v1730 = vadd.f32 %v1701, %v1729
  %1731 = vmatmul.bf16.gmra.mxu0 %v393
  %v1732 = vpop.f32.mrf.mxu0
  %v1733 = vadd.f32 %v1704, %v1732
  %v1734 = vpop.f32.mrf.mxu0
  %v1735 = vadd.f32 %v1706, %v1734
  %1736 = vdwg.mxu0
  %1737 = vmatpush.bf16.msra.mxu0 %v1247
  %1738 = vmatpush.bf16.msra.mxu0 %v1241
  %1739 = vmatpush.bf16.msra.mxu0 %v1235
  %1740 = vmatpush.bf16.msra.mxu0 %v1229
  %1741 = vmatpush.bf16.msra.mxu0 %v1223
  %1742 = vmatpush.bf16.msra.mxu0 %v1217
  %1743 = vmatpush.bf16.msra.mxu0 %v1211
  %1744 = vmatpush.bf16.msra.mxu0 %v1205
  %1745 = vmatmul.bf16.gmra.mxu0 %v379
  %v1746 = vpop.f32.mrf.mxu0
  %v1747 = vadd.f32 %v1718, %v1746
  %v1748 = vpop.f32.mrf.mxu0
  %v1749 = vadd.f32 %v1720, %v1748
  %1750 = vmatmul.bf16.gmra.mxu0 %v384
  %v1751 = vpop.f32.mrf.mxu0
  %v1752 = vadd.f32 %v1723, %v1751
  %v1753 = vpop.f32.mrf.mxu0
  %v1754 = vadd.f32 %v1725, %v1753
  %1755 = vmatmul.bf16.gmra.mxu0 %v389
  %v1756 = vpop.f32.mrf.mxu0
  %v1757 = vadd.f32 %v1728, %v1756
  %v1758 = vpop.f32.mrf.mxu0
  %v1759 = vadd.f32 %v1730, %v1758
  %1760 = vmatmul.bf16.gmra.mxu0 %v394
  %v1761 = vpop.f32.mrf.mxu0
  %v1762 = vadd.f32 %v1733, %v1761
  %v1763 = vpop.f32.mrf.mxu0
  %v1764 = vadd.f32 %v1735, %v1763
  %1765 = vdwg.mxu0
  %1766 = vmatpush.bf16.msra.mxu0 0
  %1767 = vmatpush.bf16.msra.mxu0 0
  %1768 = vmatpush.bf16.msra.mxu0 0
  %1769 = vmatpush.bf16.msra.mxu0 0
  %1770 = vmatpush.bf16.msra.mxu0 %v1271
  %1771 = vmatpush.bf16.msra.mxu0 %v1265
  %1772 = vmatpush.bf16.msra.mxu0 %v1259
  %1773 = vmatpush.bf16.msra.mxu0 %v1253
  %1774 = vmatmul.bf16.gmra.mxu0 %v1494
  %v1775 = vpop.f32.mrf.mxu0
  %v1776 = vadd.f32 %v1747, %v1775
  %v1777 = vpop.f32.mrf.mxu0
  %v1778 = vadd.f32 %v1749, %v1777
  %1779 = vmatmul.bf16.gmra.mxu0 %v1497
  %v1780 = vpop.f32.mrf.mxu0
  %v1781 = vadd.f32 %v1752, %v1780
  %v1782 = vpop.f32.mrf.mxu0
  %v1783 = vadd.f32 %v1754, %v1782
  %1784 = vmatmul.bf16.gmra.mxu0 %v1500
  %v1785 = vpop.f32.mrf.mxu0
  %v1786 = vadd.f32 %v1757, %v1785
  %v1787 = vpop.f32.mrf.mxu0
  %v1788 = vadd.f32 %v1759, %v1787
  %1789 = vmatmul.bf16.gmra.mxu0 %v1503
  %v1790 = vpop.f32.mrf.mxu0
  %v1791 = vadd.f32 %v1762, %v1790
  %v1792 = vpop.f32.mrf.mxu0
  %v1793 = vadd.f32 %v1764, %v1792
  %1794 = vdwg.mxu0
  %1795 = vmatpush.bf16.msra.mxu0 %v1104
  %1796 = vmatpush.bf16.msra.mxu0 %v1098
  %1797 = vmatpush.bf16.msra.mxu0 %v1092
  %1798 = vmatpush.bf16.msra.mxu0 %v1086
  %1799 = vmatpush.bf16.msra.mxu0 %v1080
  %1800 = vmatpush.bf16.msra.mxu0 %v1074
  %1801 = vmatpush.bf16.msra.mxu0 %v1068
  %1802 = vmatpush.bf16.msra.mxu0 %v1062
  %1803 = vmatmul.bf16.gmra.mxu0 %v376
  %v1804 = vpop.f32.mrf.mxu0
  %v1805 = vadd.f32 %v275, %v1804
  %v1806 = vpop.f32.mrf.mxu0
  %v1807 = vadd.f32 %v280, %v1806
  %1808 = vmatmul.bf16.gmra.mxu0 %v381
  %v1809 = vpop.f32.mrf.mxu0
  %v1810 = vadd.f32 %v285, %v1809
  %v1811 = vpop.f32.mrf.mxu0
  %v1812 = vadd.f32 %v290, %v1811
  %1813 = vmatmul.bf16.gmra.mxu0 %v386
  %v1814 = vpop.f32.mrf.mxu0
  %v1815 = vadd.f32 %v295, %v1814
  %v1816 = vpop.f32.mrf.mxu0
  %v1817 = vadd.f32 %v300, %v1816
  %1818 = vmatmul.bf16.gmra.mxu0 %v391
  %v1819 = vpop.f32.mrf.mxu0
  %v1820 = vadd.f32 %v305, %v1819
  %v1821 = vpop.f32.mrf.mxu0
  %v1822 = vadd.f32 %v310, %v1821
  %1823 = vdwg.mxu0
  %1824 = vmatpush.bf16.msra.mxu0 %v1152
  %1825 = vmatpush.bf16.msra.mxu0 %v1146
  %1826 = vmatpush.bf16.msra.mxu0 %v1140
  %1827 = vmatpush.bf16.msra.mxu0 %v1134
  %1828 = vmatpush.bf16.msra.mxu0 %v1128
  %1829 = vmatpush.bf16.msra.mxu0 %v1122
  %1830 = vmatpush.bf16.msra.mxu0 %v1116
  %1831 = vmatpush.bf16.msra.mxu0 %v1110
  %1832 = vmatmul.bf16.gmra.mxu0 %v377
  %v1833 = vpop.f32.mrf.mxu0
  %v1834 = vadd.f32 %v1805, %v1833
  %v1835 = vpop.f32.mrf.mxu0
  %v1836 = vadd.f32 %v1807, %v1835
  %1837 = vmatmul.bf16.gmra.mxu0 %v382
  %v1838 = vpop.f32.mrf.mxu0
  %v1839 = vadd.f32 %v1810, %v1838
  %v1840 = vpop.f32.mrf.mxu0
  %v1841 = vadd.f32 %v1812, %v1840
  %1842 = vmatmul.bf16.gmra.mxu0 %v387
  %v1843 = vpop.f32.mrf.mxu0
  %v1844 = vadd.f32 %v1815, %v1843
  %v1845 = vpop.f32.mrf.mxu0
  %v1846 = vadd.f32 %v1817, %v1845
  %1847 = vmatmul.bf16.gmra.mxu0 %v392
  %v1848 = vpop.f32.mrf.mxu0
  %v1849 = vadd.f32 %v1820, %v1848
  %v1850 = vpop.f32.mrf.mxu0
  %v1851 = vadd.f32 %v1822, %v1850
  %1852 = vdwg.mxu0
  %1853 = vmatpush.bf16.msra.mxu0 %v1200
  %1854 = vmatpush.bf16.msra.mxu0 %v1194
  %1855 = vmatpush.bf16.msra.mxu0 %v1188
  %1856 = vmatpush.bf16.msra.mxu0 %v1182
  %1857 = vmatpush.bf16.msra.mxu0 %v1176
  %1858 = vmatpush.bf16.msra.mxu0 %v1170
  %1859 = vmatpush.bf16.msra.mxu0 %v1164
  %1860 = vmatpush.bf16.msra.mxu0 %v1158
  %1861 = vmatmul.bf16.gmra.mxu0 %v378
  %v1862 = vpop.f32.mrf.mxu0
  %v1863 = vadd.f32 %v1834, %v1862
  %v1864 = vpop.f32.mrf.mxu0
  %v1865 = vadd.f32 %v1836, %v1864
  %1866 = vmatmul.bf16.gmra.mxu0 %v383
  %v1867 = vpop.f32.mrf.mxu0
  %v1868 = vadd.f32 %v1839, %v1867
  %v1869 = vpop.f32.mrf.mxu0
  %v1870 = vadd.f32 %v1841, %v1869
  %1871 = vmatmul.bf16.gmra.mxu0 %v388
  %v1872 = vpop.f32.mrf.mxu0
  %v1873 = vadd.f32 %v1844, %v1872
  %v1874 = vpop.f32.mrf.mxu0
  %v1875 = vadd.f32 %v1846, %v1874
  %1876 = vmatmul.bf16.gmra.mxu0 %v393
  %v1877 = vpop.f32.mrf.mxu0
  %v1878 = vadd.f32 %v1849, %v1877
  %v1879 = vpop.f32.mrf.mxu0
  %v1880 = vadd.f32 %v1851, %v1879
  %1881 = vdwg.mxu0
  %1882 = vmatpush.bf16.msra.mxu0 %v1248
  %1883 = vmatpush.bf16.msra.mxu0 %v1242
  %1884 = vmatpush.bf16.msra.mxu0 %v1236
  %1885 = vmatpush.bf16.msra.mxu0 %v1230
  %1886 = vmatpush.bf16.msra.mxu0 %v1224
  %1887 = vmatpush.bf16.msra.mxu0 %v1218
  %1888 = vmatpush.bf16.msra.mxu0 %v1212
  %1889 = vmatpush.bf16.msra.mxu0 %v1206
  %1890 = vmatmul.bf16.gmra.mxu0 %v379
  %v1891 = vpop.f32.mrf.mxu0
  %v1892 = vadd.f32 %v1863, %v1891
  %v1893 = vpop.f32.mrf.mxu0
  %v1894 = vadd.f32 %v1865, %v1893
  %1895 = vmatmul.bf16.gmra.mxu0 %v384
  %v1896 = vpop.f32.mrf.mxu0
  %v1897 = vadd.f32 %v1868, %v1896
  %v1898 = vpop.f32.mrf.mxu0
  %v1899 = vadd.f32 %v1870, %v1898
  %1900 = vmatmul.bf16.gmra.mxu0 %v389
  %v1901 = vpop.f32.mrf.mxu0
  %v1902 = vadd.f32 %v1873, %v1901
  %v1903 = vpop.f32.mrf.mxu0
  %v1904 = vadd.f32 %v1875, %v1903
  %1905 = vmatmul.bf16.gmra.mxu0 %v394
  %v1906 = vpop.f32.mrf.mxu0
  %v1907 = vadd.f32 %v1878, %v1906
  %v1908 = vpop.f32.mrf.mxu0
  %v1909 = vadd.f32 %v1880, %v1908
  %1910 = vdwg.mxu0
  %1911 = vmatpush.bf16.msra.mxu0 0
  %1912 = vmatpush.bf16.msra.mxu0 0
  %1913 = vmatpush.bf16.msra.mxu0 0
  %1914 = vmatpush.bf16.msra.mxu0 0
  %1915 = vmatpush.bf16.msra.mxu0 %v1272
  %1916 = vmatpush.bf16.msra.mxu0 %v1266
  %1917 = vmatpush.bf16.msra.mxu0 %v1260
  %1918 = vmatpush.bf16.msra.mxu0 %v1254
  %1919 = vmatmul.bf16.gmra.mxu0 %v1494
  %v1920 = vpop.f32.mrf.mxu0
  %v1921 = vadd.f32 %v1892, %v1920
  %v1922 = vpop.f32.mrf.mxu0
  %v1923 = vadd.f32 %v1894, %v1922
  %1924 = vmatmul.bf16.gmra.mxu0 %v1497
  %v1925 = vpop.f32.mrf.mxu0
  %v1926 = vadd.f32 %v1897, %v1925
  %v1927 = vpop.f32.mrf.mxu0
  %v1928 = vadd.f32 %v1899, %v1927
  %1929 = vmatmul.bf16.gmra.mxu0 %v1500
  %v1930 = vpop.f32.mrf.mxu0
  %v1931 = vadd.f32 %v1902, %v1930
  %v1932 = vpop.f32.mrf.mxu0
  %v1933 = vadd.f32 %v1904, %v1932
  %1934 = vmatmul.bf16.gmra.mxu0 %v1503
  %v1935 = vpop.f32.mrf.mxu0
  %v1936 = vadd.f32 %v1907, %v1935
  %v1937 = vpop.f32.mrf.mxu0
  %v1938 = vadd.f32 %v1909, %v1937
  %1939 = vdwg.mxu0
  %1940 = vmatpush.bf16.msra.mxu0 %v1105
  %1941 = vmatpush.bf16.msra.mxu0 %v1099
  %1942 = vmatpush.bf16.msra.mxu0 %v1093
  %1943 = vmatpush.bf16.msra.mxu0 %v1087
  %1944 = vmatpush.bf16.msra.mxu0 %v1081
  %1945 = vmatpush.bf16.msra.mxu0 %v1075
  %1946 = vmatpush.bf16.msra.mxu0 %v1069
  %1947 = vmatpush.bf16.msra.mxu0 %v1063
  %1948 = vmatmul.bf16.gmra.mxu0 %v376
  %v1949 = vpop.f32.mrf.mxu0
  %v1950 = vadd.f32 %v275, %v1949
  %v1951 = vpop.f32.mrf.mxu0
  %v1952 = vadd.f32 %v280, %v1951
  %1953 = vmatmul.bf16.gmra.mxu0 %v381
  %v1954 = vpop.f32.mrf.mxu0
  %v1955 = vadd.f32 %v285, %v1954
  %v1956 = vpop.f32.mrf.mxu0
  %v1957 = vadd.f32 %v290, %v1956
  %1958 = vmatmul.bf16.gmra.mxu0 %v386
  %v1959 = vpop.f32.mrf.mxu0
  %v1960 = vadd.f32 %v295, %v1959
  %v1961 = vpop.f32.mrf.mxu0
  %v1962 = vadd.f32 %v300, %v1961
  %1963 = vmatmul.bf16.gmra.mxu0 %v391
  %v1964 = vpop.f32.mrf.mxu0
  %v1965 = vadd.f32 %v305, %v1964
  %v1966 = vpop.f32.mrf.mxu0
  %v1967 = vadd.f32 %v310, %v1966
  %1968 = vdwg.mxu0
  %1969 = vmatpush.bf16.msra.mxu0 %v1153
  %1970 = vmatpush.bf16.msra.mxu0 %v1147
  %1971 = vmatpush.bf16.msra.mxu0 %v1141
  %1972 = vmatpush.bf16.msra.mxu0 %v1135
  %1973 = vmatpush.bf16.msra.mxu0 %v1129
  %1974 = vmatpush.bf16.msra.mxu0 %v1123
  %1975 = vmatpush.bf16.msra.mxu0 %v1117
  %1976 = vmatpush.bf16.msra.mxu0 %v1111
  %1977 = vmatmul.bf16.gmra.mxu0 %v377
  %v1978 = vpop.f32.mrf.mxu0
  %v1979 = vadd.f32 %v1950, %v1978
  %v1980 = vpop.f32.mrf.mxu0
  %v1981 = vadd.f32 %v1952, %v1980
  %1982 = vmatmul.bf16.gmra.mxu0 %v382
  %v1983 = vpop.f32.mrf.mxu0
  %v1984 = vadd.f32 %v1955, %v1983
  %v1985 = vpop.f32.mrf.mxu0
  %v1986 = vadd.f32 %v1957, %v1985
  %1987 = vmatmul.bf16.gmra.mxu0 %v387
  %v1988 = vpop.f32.mrf.mxu0
  %v1989 = vadd.f32 %v1960, %v1988
  %v1990 = vpop.f32.mrf.mxu0
  %v1991 = vadd.f32 %v1962, %v1990
  %1992 = vmatmul.bf16.gmra.mxu0 %v392
  %v1993 = vpop.f32.mrf.mxu0
  %v1994 = vadd.f32 %v1965, %v1993
  %v1995 = vpop.f32.mrf.mxu0
  %v1996 = vadd.f32 %v1967, %v1995
  %1997 = vdwg.mxu0
  %1998 = vmatpush.bf16.msra.mxu0 %v1201
  %1999 = vmatpush.bf16.msra.mxu0 %v1195
  %2000 = vmatpush.bf16.msra.mxu0 %v1189
  %2001 = vmatpush.bf16.msra.mxu0 %v1183
  %2002 = vmatpush.bf16.msra.mxu0 %v1177
  %2003 = vmatpush.bf16.msra.mxu0 %v1171
  %2004 = vmatpush.bf16.msra.mxu0 %v1165
  %2005 = vmatpush.bf16.msra.mxu0 %v1159
  %2006 = vmatmul.bf16.gmra.mxu0 %v378
  %v2007 = vpop.f32.mrf.mxu0
  %v2008 = vadd.f32 %v1979, %v2007
  %v2009 = vpop.f32.mrf.mxu0
  %v2010 = vadd.f32 %v1981, %v2009
  %2011 = vmatmul.bf16.gmra.mxu0 %v383
  %v2012 = vpop.f32.mrf.mxu0
  %v2013 = vadd.f32 %v1984, %v2012
  %v2014 = vpop.f32.mrf.mxu0
  %v2015 = vadd.f32 %v1986, %v2014
  %2016 = vmatmul.bf16.gmra.mxu0 %v388
  %v2017 = vpop.f32.mrf.mxu0
  %v2018 = vadd.f32 %v1989, %v2017
  %v2019 = vpop.f32.mrf.mxu0
  %v2020 = vadd.f32 %v1991, %v2019
  %2021 = vmatmul.bf16.gmra.mxu0 %v393
  %v2022 = vpop.f32.mrf.mxu0
  %v2023 = vadd.f32 %v1994, %v2022
  %v2024 = vpop.f32.mrf.mxu0
  %v2025 = vadd.f32 %v1996, %v2024
  %2026 = vdwg.mxu0
  %2027 = vmatpush.bf16.msra.mxu0 %v1249
  %2028 = vmatpush.bf16.msra.mxu0 %v1243
  %2029 = vmatpush.bf16.msra.mxu0 %v1237
  %2030 = vmatpush.bf16.msra.mxu0 %v1231
  %2031 = vmatpush.bf16.msra.mxu0 %v1225
  %2032 = vmatpush.bf16.msra.mxu0 %v1219
  %2033 = vmatpush.bf16.msra.mxu0 %v1213
  %2034 = vmatpush.bf16.msra.mxu0 %v1207
  %2035 = vmatmul.bf16.gmra.mxu0 %v379
  %v2036 = vpop.f32.mrf.mxu0
  %v2037 = vadd.f32 %v2008, %v2036
  %v2038 = vpop.f32.mrf.mxu0
  %v2039 = vadd.f32 %v2010, %v2038
  %2040 = vmatmul.bf16.gmra.mxu0 %v384
  %v2041 = vpop.f32.mrf.mxu0
  %v2042 = vadd.f32 %v2013, %v2041
  %v2043 = vpop.f32.mrf.mxu0
  %v2044 = vadd.f32 %v2015, %v2043
  %2045 = vmatmul.bf16.gmra.mxu0 %v389
  %v2046 = vpop.f32.mrf.mxu0
  %v2047 = vadd.f32 %v2018, %v2046
  %v2048 = vpop.f32.mrf.mxu0
  %v2049 = vadd.f32 %v2020, %v2048
  %2050 = vmatmul.bf16.gmra.mxu0 %v394
  %v2051 = vpop.f32.mrf.mxu0
  %v2052 = vadd.f32 %v2023, %v2051
  %v2053 = vpop.f32.mrf.mxu0
  %v2054 = vadd.f32 %v2025, %v2053
  %2055 = vdwg.mxu0
  %2056 = vmatpush.bf16.msra.mxu0 0
  %2057 = vmatpush.bf16.msra.mxu0 0
  %2058 = vmatpush.bf16.msra.mxu0 0
  %2059 = vmatpush.bf16.msra.mxu0 0
  %2060 = vmatpush.bf16.msra.mxu0 %v1273
  %2061 = vmatpush.bf16.msra.mxu0 %v1267
  %2062 = vmatpush.bf16.msra.mxu0 %v1261
  %2063 = vmatpush.bf16.msra.mxu0 %v1255
  %2064 = vmatmul.bf16.gmra.mxu0 %v1494
  %v2065 = vpop.f32.mrf.mxu0
  %v2066 = vadd.f32 %v2037, %v2065
  %v2067 = vpop.f32.mrf.mxu0
  %v2068 = vadd.f32 %v2039, %v2067
  %2069 = vmatmul.bf16.gmra.mxu0 %v1497
  %v2070 = vpop.f32.mrf.mxu0
  %v2071 = vadd.f32 %v2042, %v2070
  %v2072 = vpop.f32.mrf.mxu0
  %v2073 = vadd.f32 %v2044, %v2072
  %2074 = vmatmul.bf16.gmra.mxu0 %v1500
  %v2075 = vpop.f32.mrf.mxu0
  %v2076 = vadd.f32 %v2047, %v2075
  %v2077 = vpop.f32.mrf.mxu0
  %v2078 = vadd.f32 %v2049, %v2077
  %2079 = vmatmul.bf16.gmra.mxu0 %v1503
  %v2080 = vpop.f32.mrf.mxu0
  %v2081 = vadd.f32 %v2052, %v2080
  %v2082 = vpop.f32.mrf.mxu0
  %v2083 = vadd.f32 %v2054, %v2082
  %2084 = vdwg.mxu0
  %2085 = vmatpush.bf16.msra.mxu0 %v1106
  %2086 = vmatpush.bf16.msra.mxu0 %v1100
  %2087 = vmatpush.bf16.msra.mxu0 %v1094
  %2088 = vmatpush.bf16.msra.mxu0 %v1088
  %2089 = vmatpush.bf16.msra.mxu0 %v1082
  %2090 = vmatpush.bf16.msra.mxu0 %v1076
  %2091 = vmatpush.bf16.msra.mxu0 %v1070
  %2092 = vmatpush.bf16.msra.mxu0 %v1064
  %2093 = vmatmul.bf16.gmra.mxu0 %v376
  %v2094 = vpop.f32.mrf.mxu0
  %v2095 = vadd.f32 %v275, %v2094
  %v2096 = vpop.f32.mrf.mxu0
  %v2097 = vadd.f32 %v280, %v2096
  %2098 = vmatmul.bf16.gmra.mxu0 %v381
  %v2099 = vpop.f32.mrf.mxu0
  %v2100 = vadd.f32 %v285, %v2099
  %v2101 = vpop.f32.mrf.mxu0
  %v2102 = vadd.f32 %v290, %v2101
  %2103 = vmatmul.bf16.gmra.mxu0 %v386
  %v2104 = vpop.f32.mrf.mxu0
  %v2105 = vadd.f32 %v295, %v2104
  %v2106 = vpop.f32.mrf.mxu0
  %v2107 = vadd.f32 %v300, %v2106
  %2108 = vmatmul.bf16.gmra.mxu0 %v391
  %v2109 = vpop.f32.mrf.mxu0
  %v2110 = vadd.f32 %v305, %v2109
  %v2111 = vpop.f32.mrf.mxu0
  %v2112 = vadd.f32 %v310, %v2111
  %2113 = vdwg.mxu0
  %2114 = vmatpush.bf16.msra.mxu0 %v1154
  %2115 = vmatpush.bf16.msra.mxu0 %v1148
  %2116 = vmatpush.bf16.msra.mxu0 %v1142
  %2117 = vmatpush.bf16.msra.mxu0 %v1136
  %2118 = vmatpush.bf16.msra.mxu0 %v1130
  %2119 = vmatpush.bf16.msra.mxu0 %v1124
  %2120 = vmatpush.bf16.msra.mxu0 %v1118
  %2121 = vmatpush.bf16.msra.mxu0 %v1112
  %2122 = vmatmul.bf16.gmra.mxu0 %v377
  %v2123 = vpop.f32.mrf.mxu0
  %v2124 = vadd.f32 %v2095, %v2123
  %v2125 = vpop.f32.mrf.mxu0
  %v2126 = vadd.f32 %v2097, %v2125
  %2127 = vmatmul.bf16.gmra.mxu0 %v382
  %v2128 = vpop.f32.mrf.mxu0
  %v2129 = vadd.f32 %v2100, %v2128
  %v2130 = vpop.f32.mrf.mxu0
  %v2131 = vadd.f32 %v2102, %v2130
  %2132 = vmatmul.bf16.gmra.mxu0 %v387
  %v2133 = vpop.f32.mrf.mxu0
  %v2134 = vadd.f32 %v2105, %v2133
  %v2135 = vpop.f32.mrf.mxu0
  %v2136 = vadd.f32 %v2107, %v2135
  %2137 = vmatmul.bf16.gmra.mxu0 %v392
  %v2138 = vpop.f32.mrf.mxu0
  %v2139 = vadd.f32 %v2110, %v2138
  %v2140 = vpop.f32.mrf.mxu0
  %v2141 = vadd.f32 %v2112, %v2140
  %2142 = vdwg.mxu0
  %2143 = vmatpush.bf16.msra.mxu0 %v1202
  %2144 = vmatpush.bf16.msra.mxu0 %v1196
  %2145 = vmatpush.bf16.msra.mxu0 %v1190
  %2146 = vmatpush.bf16.msra.mxu0 %v1184
  %2147 = vmatpush.bf16.msra.mxu0 %v1178
  %2148 = vmatpush.bf16.msra.mxu0 %v1172
  %2149 = vmatpush.bf16.msra.mxu0 %v1166
  %2150 = vmatpush.bf16.msra.mxu0 %v1160
  %2151 = vmatmul.bf16.gmra.mxu0 %v378
  %v2152 = vpop.f32.mrf.mxu0
  %v2153 = vadd.f32 %v2124, %v2152
  %v2154 = vpop.f32.mrf.mxu0
  %v2155 = vadd.f32 %v2126, %v2154
  %2156 = vmatmul.bf16.gmra.mxu0 %v383
  %v2157 = vpop.f32.mrf.mxu0
  %v2158 = vadd.f32 %v2129, %v2157
  %v2159 = vpop.f32.mrf.mxu0
  %v2160 = vadd.f32 %v2131, %v2159
  %2161 = vmatmul.bf16.gmra.mxu0 %v388
  %v2162 = vpop.f32.mrf.mxu0
  %v2163 = vadd.f32 %v2134, %v2162
  %v2164 = vpop.f32.mrf.mxu0
  %v2165 = vadd.f32 %v2136, %v2164
  %2166 = vmatmul.bf16.gmra.mxu0 %v393
  %v2167 = vpop.f32.mrf.mxu0
  %v2168 = vadd.f32 %v2139, %v2167
  %v2169 = vpop.f32.mrf.mxu0
  %v2170 = vadd.f32 %v2141, %v2169
  %2171 = vdwg.mxu0
  %2172 = vmatpush.bf16.msra.mxu0 %v1250
  %2173 = vmatpush.bf16.msra.mxu0 %v1244
  %2174 = vmatpush.bf16.msra.mxu0 %v1238
  %2175 = vmatpush.bf16.msra.mxu0 %v1232
  %2176 = vmatpush.bf16.msra.mxu0 %v1226
  %2177 = vmatpush.bf16.msra.mxu0 %v1220
  %2178 = vmatpush.bf16.msra.mxu0 %v1214
  %2179 = vmatpush.bf16.msra.mxu0 %v1208
  %2180 = vmatmul.bf16.gmra.mxu0 %v379
  %v2181 = vpop.f32.mrf.mxu0
  %v2182 = vadd.f32 %v2153, %v2181
  %v2183 = vpop.f32.mrf.mxu0
  %v2184 = vadd.f32 %v2155, %v2183
  %2185 = vmatmul.bf16.gmra.mxu0 %v384
  %v2186 = vpop.f32.mrf.mxu0
  %v2187 = vadd.f32 %v2158, %v2186
  %v2188 = vpop.f32.mrf.mxu0
  %v2189 = vadd.f32 %v2160, %v2188
  %2190 = vmatmul.bf16.gmra.mxu0 %v389
  %v2191 = vpop.f32.mrf.mxu0
  %v2192 = vadd.f32 %v2163, %v2191
  %v2193 = vpop.f32.mrf.mxu0
  %v2194 = vadd.f32 %v2165, %v2193
  %2195 = vmatmul.bf16.gmra.mxu0 %v394
  %v2196 = vpop.f32.mrf.mxu0
  %v2197 = vadd.f32 %v2168, %v2196
  %v2198 = vpop.f32.mrf.mxu0
  %v2199 = vadd.f32 %v2170, %v2198
  %2200 = vdwg.mxu0
  %2201 = vmatpush.bf16.msra.mxu0 0
  %2202 = vmatpush.bf16.msra.mxu0 0
  %2203 = vmatpush.bf16.msra.mxu0 0
  %2204 = vmatpush.bf16.msra.mxu0 0
  %2205 = vmatpush.bf16.msra.mxu0 %v1274
  %2206 = vmatpush.bf16.msra.mxu0 %v1268
  %2207 = vmatpush.bf16.msra.mxu0 %v1262
  %2208 = vmatpush.bf16.msra.mxu0 %v1256
  %2209 = vmatmul.bf16.gmra.mxu0 %v1494
  %v2210 = vpop.f32.mrf.mxu0
  %v2211 = vadd.f32 %v2182, %v2210
  %v2212 = vpop.f32.mrf.mxu0
  %v2213 = vadd.f32 %v2184, %v2212
  %2214 = vmatmul.bf16.gmra.mxu0 %v1497
  %v2215 = vpop.f32.mrf.mxu0
  %v2216 = vadd.f32 %v2187, %v2215
  %v2217 = vpop.f32.mrf.mxu0
  %v2218 = vadd.f32 %v2189, %v2217
  %2219 = vmatmul.bf16.gmra.mxu0 %v1500
  %v2220 = vpop.f32.mrf.mxu0
  %v2221 = vadd.f32 %v2192, %v2220
  %v2222 = vpop.f32.mrf.mxu0
  %v2223 = vadd.f32 %v2194, %v2222
  %2224 = vmatmul.bf16.gmra.mxu0 %v1503
  %v2225 = vpop.f32.mrf.mxu0
  %v2226 = vadd.f32 %v2197, %v2225
  %v2227 = vpop.f32.mrf.mxu0
  %v2228 = vadd.f32 %v2199, %v2227
  %2229 = vdwg.mxu0
  %2230 = vmatpush.bf16.msra.mxu0 %v1107
  %2231 = vmatpush.bf16.msra.mxu0 %v1101
  %2232 = vmatpush.bf16.msra.mxu0 %v1095
  %2233 = vmatpush.bf16.msra.mxu0 %v1089
  %2234 = vmatpush.bf16.msra.mxu0 %v1083
  %2235 = vmatpush.bf16.msra.mxu0 %v1077
  %2236 = vmatpush.bf16.msra.mxu0 %v1071
  %2237 = vmatpush.bf16.msra.mxu0 %v1065
  %2238 = vmatmul.bf16.gmra.mxu0 %v376
  %v2239 = vpop.f32.mrf.mxu0
  %v2240 = vadd.f32 %v275, %v2239
  %v2241 = vpop.f32.mrf.mxu0
  %v2242 = vadd.f32 %v280, %v2241
  %2243 = vmatmul.bf16.gmra.mxu0 %v381
  %v2244 = vpop.f32.mrf.mxu0
  %v2245 = vadd.f32 %v285, %v2244
  %v2246 = vpop.f32.mrf.mxu0
  %v2247 = vadd.f32 %v290, %v2246
  %2248 = vmatmul.bf16.gmra.mxu0 %v386
  %v2249 = vpop.f32.mrf.mxu0
  %v2250 = vadd.f32 %v295, %v2249
  %v2251 = vpop.f32.mrf.mxu0
  %v2252 = vadd.f32 %v300, %v2251
  %2253 = vmatmul.bf16.gmra.mxu0 %v391
  %v2254 = vpop.f32.mrf.mxu0
  %v2255 = vadd.f32 %v305, %v2254
  %v2256 = vpop.f32.mrf.mxu0
  %v2257 = vadd.f32 %v310, %v2256
  %2258 = vdwg.mxu0
  %2259 = vmatpush.bf16.msra.mxu0 %v1155
  %2260 = vmatpush.bf16.msra.mxu0 %v1149
  %2261 = vmatpush.bf16.msra.mxu0 %v1143
  %2262 = vmatpush.bf16.msra.mxu0 %v1137
  %2263 = vmatpush.bf16.msra.mxu0 %v1131
  %2264 = vmatpush.bf16.msra.mxu0 %v1125
  %2265 = vmatpush.bf16.msra.mxu0 %v1119
  %2266 = vmatpush.bf16.msra.mxu0 %v1113
  %2267 = vmatmul.bf16.gmra.mxu0 %v377
  %v2268 = vpop.f32.mrf.mxu0
  %v2269 = vadd.f32 %v2240, %v2268
  %v2270 = vpop.f32.mrf.mxu0
  %v2271 = vadd.f32 %v2242, %v2270
  %2272 = vmatmul.bf16.gmra.mxu0 %v382
  %v2273 = vpop.f32.mrf.mxu0
  %v2274 = vadd.f32 %v2245, %v2273
  %v2275 = vpop.f32.mrf.mxu0
  %v2276 = vadd.f32 %v2247, %v2275
  %2277 = vmatmul.bf16.gmra.mxu0 %v387
  %v2278 = vpop.f32.mrf.mxu0
  %v2279 = vadd.f32 %v2250, %v2278
  %v2280 = vpop.f32.mrf.mxu0
  %v2281 = vadd.f32 %v2252, %v2280
  %2282 = vmatmul.bf16.gmra.mxu0 %v392
  %v2283 = vpop.f32.mrf.mxu0
  %v2284 = vadd.f32 %v2255, %v2283
  %v2285 = vpop.f32.mrf.mxu0
  %v2286 = vadd.f32 %v2257, %v2285
  %2287 = vdwg.mxu0
  %2288 = vmatpush.bf16.msra.mxu0 %v1203
  %2289 = vmatpush.bf16.msra.mxu0 %v1197
  %2290 = vmatpush.bf16.msra.mxu0 %v1191
  %2291 = vmatpush.bf16.msra.mxu0 %v1185
  %2292 = vmatpush.bf16.msra.mxu0 %v1179
  %2293 = vmatpush.bf16.msra.mxu0 %v1173
  %2294 = vmatpush.bf16.msra.mxu0 %v1167
  %2295 = vmatpush.bf16.msra.mxu0 %v1161
  %2296 = vmatmul.bf16.gmra.mxu0 %v378
  %v2297 = vpop.f32.mrf.mxu0
  %v2298 = vadd.f32 %v2269, %v2297
  %v2299 = vpop.f32.mrf.mxu0
  %v2300 = vadd.f32 %v2271, %v2299
  %2301 = vmatmul.bf16.gmra.mxu0 %v383
  %v2302 = vpop.f32.mrf.mxu0
  %v2303 = vadd.f32 %v2274, %v2302
  %v2304 = vpop.f32.mrf.mxu0
  %v2305 = vadd.f32 %v2276, %v2304
  %2306 = vmatmul.bf16.gmra.mxu0 %v388
  %v2307 = vpop.f32.mrf.mxu0
  %v2308 = vadd.f32 %v2279, %v2307
  %v2309 = vpop.f32.mrf.mxu0
  %v2310 = vadd.f32 %v2281, %v2309
  %2311 = vmatmul.bf16.gmra.mxu0 %v393
  %v2312 = vpop.f32.mrf.mxu0
  %v2313 = vadd.f32 %v2284, %v2312
  %v2314 = vpop.f32.mrf.mxu0
  %v2315 = vadd.f32 %v2286, %v2314
  %2316 = vdwg.mxu0
  %2317 = vmatpush.bf16.msra.mxu0 %v1251
  %2318 = vmatpush.bf16.msra.mxu0 %v1245
  %2319 = vmatpush.bf16.msra.mxu0 %v1239
  %2320 = vmatpush.bf16.msra.mxu0 %v1233
  %2321 = vmatpush.bf16.msra.mxu0 %v1227
  %2322 = vmatpush.bf16.msra.mxu0 %v1221
  %2323 = vmatpush.bf16.msra.mxu0 %v1215
  %2324 = vmatpush.bf16.msra.mxu0 %v1209
  %2325 = vmatmul.bf16.gmra.mxu0 %v379
  %v2326 = vpop.f32.mrf.mxu0
  %v2327 = vadd.f32 %v2298, %v2326
  %v2328 = vpop.f32.mrf.mxu0
  %v2329 = vadd.f32 %v2300, %v2328
  %2330 = vmatmul.bf16.gmra.mxu0 %v384
  %v2331 = vpop.f32.mrf.mxu0
  %v2332 = vadd.f32 %v2303, %v2331
  %v2333 = vpop.f32.mrf.mxu0
  %v2334 = vadd.f32 %v2305, %v2333
  %2335 = vmatmul.bf16.gmra.mxu0 %v389
  %v2336 = vpop.f32.mrf.mxu0
  %v2337 = vadd.f32 %v2308, %v2336
  %v2338 = vpop.f32.mrf.mxu0
  %v2339 = vadd.f32 %v2310, %v2338
  %2340 = vmatmul.bf16.gmra.mxu0 %v394
  %v2341 = vpop.f32.mrf.mxu0
  %v2342 = vadd.f32 %v2313, %v2341
  %v2343 = vpop.f32.mrf.mxu0
  %v2344 = vadd.f32 %v2315, %v2343
  %2345 = vdwg.mxu0
  %2346 = vmatpush.bf16.msra.mxu0 0
  %2347 = vmatpush.bf16.msra.mxu0 0
  %2348 = vmatpush.bf16.msra.mxu0 0
  %2349 = vmatpush.bf16.msra.mxu0 0
  %2350 = vmatpush.bf16.msra.mxu0 %v1275
  %2351 = vmatpush.bf16.msra.mxu0 %v1269
  %2352 = vmatpush.bf16.msra.mxu0 %v1263
  %2353 = vmatpush.bf16.msra.mxu0 %v1257
  %2354 = vmatmul.bf16.gmra.mxu0 %v1494
  %v2355 = vpop.f32.mrf.mxu0
  %v2356 = vadd.f32 %v2327, %v2355
  %v2357 = vpop.f32.mrf.mxu0
  %v2358 = vadd.f32 %v2329, %v2357
  %2359 = vmatmul.bf16.gmra.mxu0 %v1497
  %v2360 = vpop.f32.mrf.mxu0
  %v2361 = vadd.f32 %v2332, %v2360
  %v2362 = vpop.f32.mrf.mxu0
  %v2363 = vadd.f32 %v2334, %v2362
  %2364 = vmatmul.bf16.gmra.mxu0 %v1500
  %v2365 = vpop.f32.mrf.mxu0
  %v2366 = vadd.f32 %v2337, %v2365
  %v2367 = vpop.f32.mrf.mxu0
  %v2368 = vadd.f32 %v2339, %v2367
  %2369 = vmatmul.bf16.gmra.mxu0 %v1503
  %v2370 = vpop.f32.mrf.mxu0
  %v2371 = vadd.f32 %v2342, %v2370
  %v2372 = vpop.f32.mrf.mxu0
  %v2373 = vadd.f32 %v2344, %v2372
  %2374 = vdwg.mxu0
  %v2375 = vmax.f32 %v1631, 0.0
  %v2376 = vmax.f32 %v1776, 0.0
  %v2377 = vmax.f32 %v1921, 0.0
  %v2378 = vmax.f32 %v2066, 0.0
  %v2379 = vmax.f32 %v2211, 0.0
  %v2380 = vmax.f32 %v2356, 0.0
  %v2381 = vmax.f32 %v1633, 0.0
  %v2382 = vmax.f32 %v1778, 0.0
  %v2383 = vmax.f32 %v1923, 0.0
  %v2384 = vmax.f32 %v2068, 0.0
  %v2385 = vmax.f32 %v2213, 0.0
  %v2386 = vmax.f32 %v2358, 0.0
  %v2387 = vmax.f32 %v1636, 0.0
  %v2388 = vmax.f32 %v1781, 0.0
  %v2389 = vmax.f32 %v1926, 0.0
  %v2390 = vmax.f32 %v2071, 0.0
  %v2391 = vmax.f32 %v2216, 0.0
  %v2392 = vmax.f32 %v2361, 0.0
  %v2393 = vmax.f32 %v1638, 0.0
  %v2394 = vmax.f32 %v1783, 0.0
  %v2395 = vmax.f32 %v1928, 0.0
  %v2396 = vmax.f32 %v2073, 0.0
  %v2397 = vmax.f32 %v2218, 0.0
  %v2398 = vmax.f32 %v2363, 0.0
  %v2399 = vmax.f32 %v1641, 0.0
  %v2400 = vmax.f32 %v1786, 0.0
  %v2401 = vmax.f32 %v1931, 0.0
  %v2402 = vmax.f32 %v2076, 0.0
  %v2403 = vmax.f32 %v2221, 0.0
  %v2404 = vmax.f32 %v2366, 0.0
  %v2405 = vmax.f32 %v1643, 0.0
  %v2406 = vmax.f32 %v1788, 0.0
  %v2407 = vmax.f32 %v1933, 0.0
  %v2408 = vmax.f32 %v2078, 0.0
  %v2409 = vmax.f32 %v2223, 0.0
  %v2410 = vmax.f32 %v2368, 0.0
  %v2411 = vmax.f32 %v1646, 0.0
  %v2412 = vmax.f32 %v1791, 0.0
  %v2413 = vmax.f32 %v1936, 0.0
  %v2414 = vmax.f32 %v2081, 0.0
  %v2415 = vmax.f32 %v2226, 0.0
  %v2416 = vmax.f32 %v2371, 0.0
  %v2417 = vmax.f32 %v1648, 0.0
  %v2418 = vmax.f32 %v1793, 0.0
  %v2419 = vmax.f32 %v1938, 0.0
  %v2420 = vmax.f32 %v2083, 0.0
  %v2421 = vmax.f32 %v2228, 0.0
  %v2422 = vmax.f32 %v2373, 0.0
  %v2423 = vld [vmem:[%s3] sm:$0xf]
  %v2424 = vld [vmem:[%s3 + $0x4] sm:$0xf]
  %v2425 = vld [vmem:[%s3 + $0x8] sm:$0xf]
  %v2426 = vld [vmem:[%s3 + $0xc] sm:$0xf]
  %v2427 = vld [vmem:[%s3 + $0x10] sm:$0xf]
  %v2428 = vpack.c.bf16 %v2381, %v2375
  %v2429 = vpack.c.bf16 %v2382, %v2376
  %v2430 = vpack.c.bf16 %v2383, %v2377
  %v2431 = vpack.c.bf16 %v2384, %v2378
  %v2432 = vpack.c.bf16 %v2385, %v2379
  %v2433 = vpack.c.bf16 %v2386, %v2380
  %v2434 = vpack.c.bf16 %v2393, %v2387
  %v2435 = vpack.c.bf16 %v2394, %v2388
  %v2436 = vpack.c.bf16 %v2395, %v2389
  %v2437 = vpack.c.bf16 %v2396, %v2390
  %v2438 = vpack.c.bf16 %v2397, %v2391
  %v2439 = vpack.c.bf16 %v2398, %v2392
  %v2440 = vpack.c.bf16 %v2405, %v2399
  %v2441 = vpack.c.bf16 %v2406, %v2400
  %v2442 = vpack.c.bf16 %v2407, %v2401
  %v2443 = vpack.c.bf16 %v2408, %v2402
  %v2444 = vpack.c.bf16 %v2409, %v2403
  %v2445 = vpack.c.bf16 %v2410, %v2404
  %v2446 = vpack.c.bf16 %v2417, %v2411
  %v2447 = vpack.c.bf16 %v2418, %v2412
  %v2448 = vpack.c.bf16 %v2419, %v2413
  %v2449 = vpack.c.bf16 %v2420, %v2414
  %v2450 = vpack.c.bf16 %v2421, %v2415
  %v2451 = vpack.c.bf16 %v2422, %v2416
  %v2452 = vld [vmem:[%s4] sm:$0xff]
  %v2453 = vld [vmem:[%s4 + $0x8] sm:$0xff]
  %v2454 = vld [vmem:[%s4 + $0x10] sm:$0xff]
  %v2455 = vld [vmem:[%s4 + $0x18] sm:$0xff]
  %v2456 = vld [vmem:[%s4 + $0x20] sm:$0xff]
  %2458 = vset.pattern.permute.xlu0 0
  %2459 = vperm.xlu0 %2458, %v2452
  %v2460 = vpop.permute.xlu0 %2459
  %2463 = vset.pattern.permute.xlu0 0
  %2464 = vperm.xlu0 %2463, %v2453
  %v2465 = vpop.permute.xlu0 %2464
  %2468 = vset.pattern.permute.xlu0 0
  %2469 = vperm.xlu0 %2468, %v2454
  %v2470 = vpop.permute.xlu0 %2469
  %2473 = vset.pattern.permute.xlu0 0
  %2474 = vperm.xlu0 %2473, %v2455
  %v2475 = vpop.permute.xlu0 %2474
  %2478 = vset.pattern.permute.xlu0 0
  %2479 = vperm.xlu0 %2478, %v2456
  %v2480 = vpop.permute.xlu0 %2479
  %v2487 = vunpack.c.l.b16 %v2423
  %v2488 = vunpack.c.l.b16 %v2424
  %v2489 = vunpack.c.l.b16 %v2425
  %v2490 = vunpack.c.l.b16 %v2426
  %v2491 = vunpack.c.l.b16 %v2427
  %v2492 = vpack.c.b16 %v2488, %v2487
  %v2493 = vpack.c.b16 %v2490, %v2489
  %v2494 = vpack.c.b16 %v2491, %v2491
  %v2496 = vsel %vm1492, %v2492, 0
  %v2499 = vsel %vm1492, %v2493, 0
  %v2502 = vsel %vm1492, %v2494, 0
  %2504 = vmatpush.bf16.msra.mxu0 0
  %2505 = vmatpush.bf16.msra.mxu0 0
  %2506 = vmatpush.bf16.msra.mxu0 0
  %2507 = vmatpush.bf16.msra.mxu0 0
  %2508 = vmatpush.bf16.msra.mxu0 %v2446
  %2509 = vmatpush.bf16.msra.mxu0 %v2440
  %2510 = vmatpush.bf16.msra.mxu0 %v2434
  %2511 = vmatpush.bf16.msra.mxu0 %v2428
  %2512 = vmatmul.bf16.gmra.mxu0 %v2496
  %v2513 = vpop.f32.mrf.mxu0
  %v2514 = vadd.f32 %v2460, %v2513
  %v2515 = vpop.f32.mrf.mxu0
  %v2516 = vadd.f32 %v2465, %v2515
  %2517 = vmatmul.bf16.gmra.mxu0 %v2499
  %v2518 = vpop.f32.mrf.mxu0
  %v2519 = vadd.f32 %v2470, %v2518
  %v2520 = vpop.f32.mrf.mxu0
  %v2521 = vadd.f32 %v2475, %v2520
  %2522 = vmatmul.bf16.gmra.mxu0 %v2502
  %v2523 = vpop.f32.mrf.mxu0
  %v2524 = vadd.f32 %v2480, %v2523
  %v2525 = vpop.f32.mrf.mxu0
  %2526 = vdwg.mxu0
  %2527 = vmatpush.bf16.msra.mxu0 0
  %2528 = vmatpush.bf16.msra.mxu0 0
  %2529 = vmatpush.bf16.msra.mxu0 0
  %2530 = vmatpush.bf16.msra.mxu0 0
  %2531 = vmatpush.bf16.msra.mxu0 %v2447
  %2532 = vmatpush.bf16.msra.mxu0 %v2441
  %2533 = vmatpush.bf16.msra.mxu0 %v2435
  %2534 = vmatpush.bf16.msra.mxu0 %v2429
  %2535 = vmatmul.bf16.gmra.mxu0 %v2496
  %v2536 = vpop.f32.mrf.mxu0
  %v2537 = vadd.f32 %v2460, %v2536
  %v2538 = vpop.f32.mrf.mxu0
  %v2539 = vadd.f32 %v2465, %v2538
  %2540 = vmatmul.bf16.gmra.mxu0 %v2499
  %v2541 = vpop.f32.mrf.mxu0
  %v2542 = vadd.f32 %v2470, %v2541
  %v2543 = vpop.f32.mrf.mxu0
  %v2544 = vadd.f32 %v2475, %v2543
  %2545 = vmatmul.bf16.gmra.mxu0 %v2502
  %v2546 = vpop.f32.mrf.mxu0
  %v2547 = vadd.f32 %v2480, %v2546
  %v2548 = vpop.f32.mrf.mxu0
  %2549 = vdwg.mxu0
  %2550 = vmatpush.bf16.msra.mxu0 0
  %2551 = vmatpush.bf16.msra.mxu0 0
  %2552 = vmatpush.bf16.msra.mxu0 0
  %2553 = vmatpush.bf16.msra.mxu0 0
  %2554 = vmatpush.bf16.msra.mxu0 %v2448
  %2555 = vmatpush.bf16.msra.mxu0 %v2442
  %2556 = vmatpush.bf16.msra.mxu0 %v2436
  %2557 = vmatpush.bf16.msra.mxu0 %v2430
  %2558 = vmatmul.bf16.gmra.mxu0 %v2496
  %v2559 = vpop.f32.mrf.mxu0
  %v2560 = vadd.f32 %v2460, %v2559
  %v2561 = vpop.f32.mrf.mxu0
  %v2562 = vadd.f32 %v2465, %v2561
  %2563 = vmatmul.bf16.gmra.mxu0 %v2499
  %v2564 = vpop.f32.mrf.mxu0
  %v2565 = vadd.f32 %v2470, %v2564
  %v2566 = vpop.f32.mrf.mxu0
  %v2567 = vadd.f32 %v2475, %v2566
  %2568 = vmatmul.bf16.gmra.mxu0 %v2502
  %v2569 = vpop.f32.mrf.mxu0
  %v2570 = vadd.f32 %v2480, %v2569
  %v2571 = vpop.f32.mrf.mxu0
  %2572 = vdwg.mxu0
  %2573 = vmatpush.bf16.msra.mxu0 0
  %2574 = vmatpush.bf16.msra.mxu0 0
  %2575 = vmatpush.bf16.msra.mxu0 0
  %2576 = vmatpush.bf16.msra.mxu0 0
  %2577 = vmatpush.bf16.msra.mxu0 %v2449
  %2578 = vmatpush.bf16.msra.mxu0 %v2443
  %2579 = vmatpush.bf16.msra.mxu0 %v2437
  %2580 = vmatpush.bf16.msra.mxu0 %v2431
  %2581 = vmatmul.bf16.gmra.mxu0 %v2496
  %v2582 = vpop.f32.mrf.mxu0
  %v2583 = vadd.f32 %v2460, %v2582
  %v2584 = vpop.f32.mrf.mxu0
  %v2585 = vadd.f32 %v2465, %v2584
  %2586 = vmatmul.bf16.gmra.mxu0 %v2499
  %v2587 = vpop.f32.mrf.mxu0
  %v2588 = vadd.f32 %v2470, %v2587
  %v2589 = vpop.f32.mrf.mxu0
  %v2590 = vadd.f32 %v2475, %v2589
  %2591 = vmatmul.bf16.gmra.mxu0 %v2502
  %v2592 = vpop.f32.mrf.mxu0
  %v2593 = vadd.f32 %v2480, %v2592
  %v2594 = vpop.f32.mrf.mxu0
  %2595 = vdwg.mxu0
  %2596 = vmatpush.bf16.msra.mxu0 0
  %2597 = vmatpush.bf16.msra.mxu0 0
  %2598 = vmatpush.bf16.msra.mxu0 0
  %2599 = vmatpush.bf16.msra.mxu0 0
  %2600 = vmatpush.bf16.msra.mxu0 %v2450
  %2601 = vmatpush.bf16.msra.mxu0 %v2444
  %2602 = vmatpush.bf16.msra.mxu0 %v2438
  %2603 = vmatpush.bf16.msra.mxu0 %v2432
  %2604 = vmatmul.bf16.gmra.mxu0 %v2496
  %v2605 = vpop.f32.mrf.mxu0
  %v2606 = vadd.f32 %v2460, %v2605
  %v2607 = vpop.f32.mrf.mxu0
  %v2608 = vadd.f32 %v2465, %v2607
  %2609 = vmatmul.bf16.gmra.mxu0 %v2499
  %v2610 = vpop.f32.mrf.mxu0
  %v2611 = vadd.f32 %v2470, %v2610
  %v2612 = vpop.f32.mrf.mxu0
  %v2613 = vadd.f32 %v2475, %v2612
  %2614 = vmatmul.bf16.gmra.mxu0 %v2502
  %v2615 = vpop.f32.mrf.mxu0
  %v2616 = vadd.f32 %v2480, %v2615
  %v2617 = vpop.f32.mrf.mxu0
  %2618 = vdwg.mxu0
  %2619 = vmatpush.bf16.msra.mxu0 0
  %2620 = vmatpush.bf16.msra.mxu0 0
  %2621 = vmatpush.bf16.msra.mxu0 0
  %2622 = vmatpush.bf16.msra.mxu0 0
  %2623 = vmatpush.bf16.msra.mxu0 %v2451
  %2624 = vmatpush.bf16.msra.mxu0 %v2445
  %2625 = vmatpush.bf16.msra.mxu0 %v2439
  %2626 = vmatpush.bf16.msra.mxu0 %v2433
  %2627 = vmatmul.bf16.gmra.mxu0 %v2496
  %v2628 = vpop.f32.mrf.mxu0
  %v2629 = vadd.f32 %v2460, %v2628
  %v2630 = vpop.f32.mrf.mxu0
  %v2631 = vadd.f32 %v2465, %v2630
  %2632 = vmatmul.bf16.gmra.mxu0 %v2499
  %v2633 = vpop.f32.mrf.mxu0
  %v2634 = vadd.f32 %v2470, %v2633
  %v2635 = vpop.f32.mrf.mxu0
  %v2636 = vadd.f32 %v2475, %v2635
  %2637 = vmatmul.bf16.gmra.mxu0 %v2502
  %v2638 = vpop.f32.mrf.mxu0
  %v2639 = vadd.f32 %v2480, %v2638
  %v2640 = vpop.f32.mrf.mxu0
  %2641 = vdwg.mxu0
  %v2642 = vxor.u32 %v2514, 2147483648
  %v2643 = vxor.u32 %v2537, 2147483648
  %v2644 = vxor.u32 %v2560, 2147483648
  %v2645 = vxor.u32 %v2583, 2147483648
  %v2646 = vxor.u32 %v2606, 2147483648
  %v2647 = vxor.u32 %v2629, 2147483648
  %v2648 = vmul.f32 %v2642, 1.442695
  %v2649 = vpow.pop %v2648
  %v2650 = vmul.f32 %v2643, 1.442695
  %v2651 = vpow.pop %v2650
  %v2652 = vmul.f32 %v2644, 1.442695
  %v2653 = vpow.pop %v2652
  %v2654 = vmul.f32 %v2645, 1.442695
  %v2655 = vpow.pop %v2654
  %v2656 = vmul.f32 %v2646, 1.442695
  %v2657 = vpow.pop %v2656
  %v2658 = vmul.f32 %v2647, 1.442695
  %v2659 = vpow.pop %v2658
  %v2660 = vadd.f32 %v2649, 1.0
  %v2661 = vadd.f32 %v2651, 1.0
  %v2662 = vadd.f32 %v2653, 1.0
  %v2663 = vadd.f32 %v2655, 1.0
  %v2664 = vadd.f32 %v2657, 1.0
  %v2665 = vadd.f32 %v2659, 1.0
  %v2666 = vrcp.pop %v2660
  %v2667 = vmul.f32 %v2660, %v2666
  %v2668 = vsub.f32 1.0, %v2667
  %v2669 = vmul.f32 %v2666, %v2668
  %v2670 = vadd.f32 %v2666, %v2669
  %vm2671 = vweird.f32 %v2660
  %vm2672 = vweird.f32 %v2666
  %vm2673 = vmor %vm2671, %vm2672
  %v2674 = vsel %vm2673, %v2666, %v2670
  %v2675 = vand.u32 2147483647, %v2660
  %vm2676 = vcmp.eq.f32.partialorder %v2675, 8.507059e+37
  %v2677 = vand.u32 %v2660, 2147483648
  %v2678 = vor.u32 1.1754944e-38, %v2677
  %v2679 = vsel %vm2676, %v2678, %v2674
  %v2680 = vmul.f32 1.0, %v2679
  %v2681 = vrcp.pop %v2661
  %v2682 = vmul.f32 %v2661, %v2681
  %v2683 = vsub.f32 1.0, %v2682
  %v2684 = vmul.f32 %v2681, %v2683
  %v2685 = vadd.f32 %v2681, %v2684
  %vm2686 = vweird.f32 %v2661
  %vm2687 = vweird.f32 %v2681
  %vm2688 = vmor %vm2686, %vm2687
  %v2689 = vsel %vm2688, %v2681, %v2685
  %v2690 = vand.u32 2147483647, %v2661
  %vm2691 = vcmp.eq.f32.partialorder %v2690, 8.507059e+37
  %v2692 = vand.u32 %v2661, 2147483648
  %v2693 = vor.u32 1.1754944e-38, %v2692
  %v2694 = vsel %vm2691, %v2693, %v2689
  %v2695 = vmul.f32 1.0, %v2694
  %v2696 = vrcp.pop %v2662
  %v2697 = vmul.f32 %v2662, %v2696
  %v2698 = vsub.f32 1.0, %v2697
  %v2699 = vmul.f32 %v2696, %v2698
  %v2700 = vadd.f32 %v2696, %v2699
  %vm2701 = vweird.f32 %v2662
  %vm2702 = vweird.f32 %v2696
  %vm2703 = vmor %vm2701, %vm2702
  %v2704 = vsel %vm2703, %v2696, %v2700
  %v2705 = vand.u32 2147483647, %v2662
  %vm2706 = vcmp.eq.f32.partialorder %v2705, 8.507059e+37
  %v2707 = vand.u32 %v2662, 2147483648
  %v2708 = vor.u32 1.1754944e-38, %v2707
  %v2709 = vsel %vm2706, %v2708, %v2704
  %v2710 = vmul.f32 1.0, %v2709
  %v2711 = vrcp.pop %v2663
  %v2712 = vmul.f32 %v2663, %v2711
  %v2713 = vsub.f32 1.0, %v2712
  %v2714 = vmul.f32 %v2711, %v2713
  %v2715 = vadd.f32 %v2711, %v2714
  %vm2716 = vweird.f32 %v2663
  %vm2717 = vweird.f32 %v2711
  %vm2718 = vmor %vm2716, %vm2717
  %v2719 = vsel %vm2718, %v2711, %v2715
  %v2720 = vand.u32 2147483647, %v2663
  %vm2721 = vcmp.eq.f32.partialorder %v2720, 8.507059e+37
  %v2722 = vand.u32 %v2663, 2147483648
  %v2723 = vor.u32 1.1754944e-38, %v2722
  %v2724 = vsel %vm2721, %v2723, %v2719
  %v2725 = vmul.f32 1.0, %v2724
  %v2726 = vrcp.pop %v2664
  %v2727 = vmul.f32 %v2664, %v2726
  %v2728 = vsub.f32 1.0, %v2727
  %v2729 = vmul.f32 %v2726, %v2728
  %v2730 = vadd.f32 %v2726, %v2729
  %vm2731 = vweird.f32 %v2664
  %vm2732 = vweird.f32 %v2726
  %vm2733 = vmor %vm2731, %vm2732
  %v2734 = vsel %vm2733, %v2726, %v2730
  %v2735 = vand.u32 2147483647, %v2664
  %vm2736 = vcmp.eq.f32.partialorder %v2735, 8.507059e+37
  %v2737 = vand.u32 %v2664, 2147483648
  %v2738 = vor.u32 1.1754944e-38, %v2737
  %v2739 = vsel %vm2736, %v2738, %v2734
  %v2740 = vmul.f32 1.0, %v2739
  %v2741 = vrcp.pop %v2665
  %v2742 = vmul.f32 %v2665, %v2741
  %v2743 = vsub.f32 1.0, %v2742
  %v2744 = vmul.f32 %v2741, %v2743
  %v2745 = vadd.f32 %v2741, %v2744
  %vm2746 = vweird.f32 %v2665
  %vm2747 = vweird.f32 %v2741
  %vm2748 = vmor %vm2746, %vm2747
  %v2749 = vsel %vm2748, %v2741, %v2745
  %v2750 = vand.u32 2147483647, %v2665
  %vm2751 = vcmp.eq.f32.partialorder %v2750, 8.507059e+37
  %v2752 = vand.u32 %v2665, 2147483648
  %v2753 = vor.u32 1.1754944e-38, %v2752
  %v2754 = vsel %vm2751, %v2753, %v2749
  %v2755 = vmul.f32 1.0, %v2754
  %v2756 = vmin.f32 %v2521, 4.1351666
  %v2757 = vmin.f32 %v2544, 4.1351666
  %v2758 = vmin.f32 %v2567, 4.1351666
  %v2759 = vmin.f32 %v2590, 4.1351666
  %v2760 = vmin.f32 %v2613, 4.1351666
  %v2761 = vmin.f32 %v2636, 4.1351666
  %v2762 = vmin.f32 %v2524, 4.1351666
  %v2763 = vmin.f32 %v2547, 4.1351666
  %v2764 = vmin.f32 %v2570, 4.1351666
  %v2765 = vmin.f32 %v2593, 4.1351666
  %v2766 = vmin.f32 %v2616, 4.1351666
  %v2767 = vmin.f32 %v2639, 4.1351666
  %v2768 = vld [vmem:[%s5] sm:$0xff]
  %v2769 = vld [vmem:[%s5 + $0x8] sm:$0xff]
  %v2770 = vld [vmem:[%s5 + $0x10] sm:$0xff]
  %v2771 = vld [vmem:[%s5 + $0x18] sm:$0xff]
  %v2772 = vld [vmem:[%s5 + $0x20] sm:$0xff]
  %v2773 = vld [vmem:[%s5 + $0x28] sm:$0xff]
  %v2774 = vld [vmem:[%s5 + $0x30] sm:$0xff]
  %v2775 = vld [vmem:[%s5 + $0x38] sm:$0xff]
  %v2776 = vld [vmem:[%s5 + $0x40] sm:$0xff]
  %v2777 = vld [vmem:[%s5 + $0x48] sm:$0xff]
  %v2778 = vld [vmem:[%s5 + $0x50] sm:$0xff]
  %v2779 = vld [vmem:[%s5 + $0x58] sm:$0xff]
  %v2780 = vld [vmem:[%s5 + $0x60] sm:$0xff]
  %v2781 = vld [vmem:[%s5 + $0x68] sm:$0xff]
  %v2782 = vld [vmem:[%s5 + $0x70] sm:$0xff]
  %v2783 = vld [vmem:[%s5 + $0x78] sm:$0xff]
  %v2784 = vld [vmem:[%s5 + $0x80] sm:$0xff]
  %v2785 = vld [vmem:[%s5 + $0x88] sm:$0xff]
  %v2786 = vld [vmem:[%s5 + $0x90] sm:$0xff]
  %v2787 = vld [vmem:[%s5 + $0x98] sm:$0xff]
  %v2788 = vld [vmem:[%s5 + $0xa0] sm:$0xff]
  %v2789 = vld [vmem:[%s5 + $0xa8] sm:$0xff]
  %v2790 = vld [vmem:[%s5 + $0xb0] sm:$0xff]
  %v2791 = vld [vmem:[%s5 + $0xb8] sm:$0xff]
  %v2792 = vmul.f32 %v2516, %v2780
  %v2793 = vmul.f32 %v2539, %v2781
  %v2794 = vmul.f32 %v2562, %v2782
  %v2795 = vmul.f32 %v2585, %v2783
  %v2796 = vmul.f32 %v2608, %v2784
  %v2797 = vmul.f32 %v2631, %v2785
  %v2798 = vadd.f32 %v2792, %v2768
  %v2799 = vadd.f32 %v2793, %v2769
  %v2800 = vadd.f32 %v2794, %v2770
  %v2801 = vadd.f32 %v2795, %v2771
  %v2802 = vadd.f32 %v2796, %v2772
  %v2803 = vadd.f32 %v2797, %v2773
  %v2804 = vmul.f32 %v2519, %v2786
  %v2805 = vmul.f32 %v2542, %v2787
  %v2806 = vmul.f32 %v2565, %v2788
  %v2807 = vmul.f32 %v2588, %v2789
  %v2808 = vmul.f32 %v2611, %v2790
  %v2809 = vmul.f32 %v2634, %v2791
  %v2810 = vadd.f32 %v2804, %v2774
  %v2811 = vadd.f32 %v2805, %v2775
  %v2812 = vadd.f32 %v2806, %v2776
  %v2813 = vadd.f32 %v2807, %v2777
  %v2814 = vadd.f32 %v2808, %v2778
  %v2815 = vadd.f32 %v2809, %v2779
  %v2816 = vmul.f32 %v2756, 1.442695
  %v2817 = vpow.pop %v2816
  %v2818 = vmul.f32 %v2757, 1.442695
  %v2819 = vpow.pop %v2818
  %v2820 = vmul.f32 %v2758, 1.442695
  %v2821 = vpow.pop %v2820
  %v2822 = vmul.f32 %v2759, 1.442695
  %v2823 = vpow.pop %v2822
  %v2824 = vmul.f32 %v2760, 1.442695
  %v2825 = vpow.pop %v2824
  %v2826 = vmul.f32 %v2761, 1.442695
  %v2827 = vpow.pop %v2826
  %v2828 = vmul.f32 %v2817, %v2780
  %v2829 = vmul.f32 %v2819, %v2781
  %v2830 = vmul.f32 %v2821, %v2782
  %v2831 = vmul.f32 %v2823, %v2783
  %v2832 = vmul.f32 %v2825, %v2784
  %v2833 = vmul.f32 %v2827, %v2785
  %v2834 = vmul.f32 %v2762, 1.442695
  %v2835 = vpow.pop %v2834
  %v2836 = vmul.f32 %v2763, 1.442695
  %v2837 = vpow.pop %v2836
  %v2838 = vmul.f32 %v2764, 1.442695
  %v2839 = vpow.pop %v2838
  %v2840 = vmul.f32 %v2765, 1.442695
  %v2841 = vpow.pop %v2840
  %v2842 = vmul.f32 %v2766, 1.442695
  %v2843 = vpow.pop %v2842
  %v2844 = vmul.f32 %v2767, 1.442695
  %v2845 = vpow.pop %v2844
  %v2846 = vmul.f32 %v2835, %v2786
  %v2847 = vmul.f32 %v2837, %v2787
  %v2848 = vmul.f32 %v2839, %v2788
  %v2849 = vmul.f32 %v2841, %v2789
  %v2850 = vmul.f32 %v2843, %v2790
  %v2851 = vmul.f32 %v2845, %v2791
  %v2852 = vmul.f32 %v2828, 0.5
  %v2853 = vmul.f32 %v2829, 0.5
  %v2854 = vmul.f32 %v2830, 0.5
  %v2855 = vmul.f32 %v2831, 0.5
  %v2856 = vmul.f32 %v2832, 0.5
  %v2857 = vmul.f32 %v2833, 0.5
  %v2858 = vsub.f32 %v2798, %v2852
  %v2859 = vsub.f32 %v2799, %v2853
  %v2860 = vsub.f32 %v2800, %v2854
  %v2861 = vsub.f32 %v2801, %v2855
  %v2862 = vsub.f32 %v2802, %v2856
  %v2863 = vsub.f32 %v2803, %v2857
  %v2864 = vmax.f32 %v2858, 0.0
  %v2865 = vmax.f32 %v2859, 0.0
  %v2866 = vmax.f32 %v2860, 0.0
  %v2867 = vmax.f32 %v2861, 0.0
  %v2868 = vmax.f32 %v2862, 0.0
  %v2869 = vmax.f32 %v2863, 0.0
  %v2870 = vmin.f32 %v2864, 64.0
  %v2871 = vmin.f32 %v2865, 64.0
  %v2872 = vmin.f32 %v2866, 64.0
  %v2873 = vmin.f32 %v2867, 64.0
  %v2874 = vmin.f32 %v2868, 64.0
  %v2875 = vmin.f32 %v2869, 64.0
  %v2876 = vmul.f32 %v2846, 0.5
  %v2877 = vmul.f32 %v2847, 0.5
  %v2878 = vmul.f32 %v2848, 0.5
  %v2879 = vmul.f32 %v2849, 0.5
  %v2880 = vmul.f32 %v2850, 0.5
  %v2881 = vmul.f32 %v2851, 0.5
  %v2882 = vsub.f32 %v2810, %v2876
  %v2883 = vsub.f32 %v2811, %v2877
  %v2884 = vsub.f32 %v2812, %v2878
  %v2885 = vsub.f32 %v2813, %v2879
  %v2886 = vsub.f32 %v2814, %v2880
  %v2887 = vsub.f32 %v2815, %v2881
  %v2888 = vmax.f32 %v2882, 0.0
  %v2889 = vmax.f32 %v2883, 0.0
  %v2890 = vmax.f32 %v2884, 0.0
  %v2891 = vmax.f32 %v2885, 0.0
  %v2892 = vmax.f32 %v2886, 0.0
  %v2893 = vmax.f32 %v2887, 0.0
  %v2894 = vmin.f32 %v2888, 64.0
  %v2895 = vmin.f32 %v2889, 64.0
  %v2896 = vmin.f32 %v2890, 64.0
  %v2897 = vmin.f32 %v2891, 64.0
  %v2898 = vmin.f32 %v2892, 64.0
  %v2899 = vmin.f32 %v2893, 64.0
  %v2900 = vadd.f32 %v2798, %v2852
  %v2901 = vadd.f32 %v2799, %v2853
  %v2902 = vadd.f32 %v2800, %v2854
  %v2903 = vadd.f32 %v2801, %v2855
  %v2904 = vadd.f32 %v2802, %v2856
  %v2905 = vadd.f32 %v2803, %v2857
  %v2906 = vmax.f32 %v2900, 0.0
  %v2907 = vmax.f32 %v2901, 0.0
  %v2908 = vmax.f32 %v2902, 0.0
  %v2909 = vmax.f32 %v2903, 0.0
  %v2910 = vmax.f32 %v2904, 0.0
  %v2911 = vmax.f32 %v2905, 0.0
  %v2912 = vmin.f32 %v2906, 64.0
  %v2913 = vmin.f32 %v2907, 64.0
  %v2914 = vmin.f32 %v2908, 64.0
  %v2915 = vmin.f32 %v2909, 64.0
  %v2916 = vmin.f32 %v2910, 64.0
  %v2917 = vmin.f32 %v2911, 64.0
  %v2918 = vadd.f32 %v2810, %v2876
  %v2919 = vadd.f32 %v2811, %v2877
  %v2920 = vadd.f32 %v2812, %v2878
  %v2921 = vadd.f32 %v2813, %v2879
  %v2922 = vadd.f32 %v2814, %v2880
  %v2923 = vadd.f32 %v2815, %v2881
  %v2924 = vmax.f32 %v2918, 0.0
  %v2925 = vmax.f32 %v2919, 0.0
  %v2926 = vmax.f32 %v2920, 0.0
  %v2927 = vmax.f32 %v2921, 0.0
  %v2928 = vmax.f32 %v2922, 0.0
  %v2929 = vmax.f32 %v2923, 0.0
  %v2930 = vmin.f32 %v2924, 64.0
  %v2931 = vmin.f32 %v2925, 64.0
  %v2932 = vmin.f32 %v2926, 64.0
  %v2933 = vmin.f32 %v2927, 64.0
  %v2934 = vmin.f32 %v2928, 64.0
  %v2935 = vmin.f32 %v2929, 64.0
  %2936 = vst [vmem:[%s6] sm:$0xff] %v2680
  %2937 = vst [vmem:[%s6 + $0x8] sm:$0xff] %v2695
  %2938 = vst [vmem:[%s6 + $0x10] sm:$0xff] %v2710
  %2939 = vst [vmem:[%s6 + $0x18] sm:$0xff] %v2725
  %2940 = vst [vmem:[%s6 + $0x20] sm:$0xff] %v2740
  %2941 = vst [vmem:[%s6 + $0x28] sm:$0xff] %v2755
  %2942 = vst [vmem:[%s6 + $0x30] sm:$0xff] %v2870
  %2943 = vst [vmem:[%s6 + $0x38] sm:$0xff] %v2871
  %2944 = vst [vmem:[%s6 + $0x40] sm:$0xff] %v2872
  %2945 = vst [vmem:[%s6 + $0x48] sm:$0xff] %v2873
  %2946 = vst [vmem:[%s6 + $0x50] sm:$0xff] %v2874
  %2947 = vst [vmem:[%s6 + $0x58] sm:$0xff] %v2875
  %2948 = vst [vmem:[%s6 + $0x60] sm:$0xff] %v2894
  %2949 = vst [vmem:[%s6 + $0x68] sm:$0xff] %v2895
  %2950 = vst [vmem:[%s6 + $0x70] sm:$0xff] %v2896
  %2951 = vst [vmem:[%s6 + $0x78] sm:$0xff] %v2897
  %2952 = vst [vmem:[%s6 + $0x80] sm:$0xff] %v2898
  %2953 = vst [vmem:[%s6 + $0x88] sm:$0xff] %v2899
  %2954 = vst [vmem:[%s6 + $0x90] sm:$0xff] %v2912
  %2955 = vst [vmem:[%s6 + $0x98] sm:$0xff] %v2913
  %2956 = vst [vmem:[%s6 + $0xa0] sm:$0xff] %v2914
  %2957 = vst [vmem:[%s6 + $0xa8] sm:$0xff] %v2915
  %2958 = vst [vmem:[%s6 + $0xb0] sm:$0xff] %v2916
  %2959 = vst [vmem:[%s6 + $0xb8] sm:$0xff] %v2917
  %2960 = vst [vmem:[%s6 + $0xc0] sm:$0xff] %v2930
  %2961 = vst [vmem:[%s6 + $0xc8] sm:$0xff] %v2931
  %2962 = vst [vmem:[%s6 + $0xd0] sm:$0xff] %v2932
  %2963 = vst [vmem:[%s6 + $0xd8] sm:$0xff] %v2933
  %2964 = vst [vmem:[%s6 + $0xe0] sm:$0xff] %v2934
  %2965 = vst [vmem:[%s6 + $0xe8] sm:$0xff] %v2935
  // Predicated region
  $region26: #{fwd.1} parent=0 // pred_check
    _
  $region27: #{fwd.1} parent=0 // pred_check_branch
    %2967 = sbr.rel (0) target = $region29
  $region28: #{fwd.1} parent=0 // pred_region
    _
  $region29: #{fwd.1} parent=0 // pred_fallthru
    _
  // Predicated region
  $region30: #{fwd.1} parent=0 // pred_check
    _
  $region31: #{fwd.1} parent=0 // pred_check_branch
    %2969 = sbr.rel (0) target = $region33
  $region32: #{fwd.1} parent=0 // pred_region
    _
  $region33: #{fwd.1} parent=0 // pred_fallthru
    _

</llo_original>
